<compile_context>
chip_gen: v6e
topology: v6e:2x2x1
jax: 0.10.0
libtpu: 0.0.40
codegen_flags: <defaults>
</compile_context>

<pallas_src>
import functools
from math import sqrt

import jax
import jax.numpy as jnp
from jax import lax
from jax.experimental import pallas as pl
from jax.experimental.pallas import tpu as pltpu


def _round_up(x, m):
    return (x + m - 1) // m * m


def _dense_coattn_kernel(v1_ref, v2_ref, w1_ref, w2_ref, o1_ref, o2_ref,
                         q1_scr, q2_scr, *, num_heads, d_kp):
    v1b = v1_ref[0]                      # (S1, D1p), native dtype -> MXU directly
    v2b = v2_ref[0]                      # (S2, D2p)
    S1 = v1b.shape[0]
    S2 = v2b.shape[0]

    # Fused head projections: ONE wide MXU matmul per modality.  Head h lives
    # in lanes [h*d_kp, h*d_kp + d_k); padding lanes are zero.  1/sqrt(d_k) is
    # pre-folded into w1 (q1 feeds both score directions).  Stores to the q
    # scratch are lane-dense (width = num_heads * d_kp, multiple of 128).
    q1_scr[...] = jnp.dot(v1b, w1_ref[...], preferred_element_type=jnp.float32)
    q2_scr[...] = jnp.dot(v2b, w2_ref[...], preferred_element_type=jnp.float32)

    def head_body(h, carry):
        acc1, acc2 = carry                           # (S2, S1) f32 running means
        off = pl.multiple_of(h * d_kp, 128)          # aligned 128-lane slab
        q1h = q1_scr[:, pl.ds(off, d_kp)]            # (S1, d_kp)
        q2h = q2_scr[:, pl.ds(off, d_kp)]            # (S2, d_kp)

        # One MXU call per head serves BOTH attention directions
        # (scores2 == scores1^T).  Zero-padded d columns contribute nothing.
        sc = lax.dot_general(q2h, q1h, (((1,), (1,)), ((), ())),
                             preferred_element_type=jnp.float32)   # (S2, S1)

        # Single exp with a joint max; both softmax directions reuse e.
        # The joint max dominates row and column maxima -> exp args <= 0.
        m = jnp.max(sc, keepdims=True)               # (1, 1)
        e = jnp.exp(sc - m)                          # (S2, S1)
        # 1/num_heads folded into the tiny denominators (head-mean of probs).
        l1 = jnp.sum(e, axis=1, keepdims=True) * num_heads   # (S2, 1) row sums
        l2 = jnp.sum(e, axis=0, keepdims=True) * num_heads   # (1, S1) col sums
        acc1 = acc1 + e * pl.reciprocal(l1, approx=False)
        acc2 = acc2 + e * pl.reciprocal(l2, approx=False)
        return acc1, acc2

    zeros = jnp.zeros((S2, S1), jnp.float32)
    acc1, acc2 = lax.fori_loop(0, num_heads, head_body, (zeros, zeros),
                               unroll=True)

    # weighted1 = (mean_h softmax_{S1}) @ value1 : (S2,S1)@(S1,D1p).
    # (Probabilities cast to the value dtype: for bf16 inputs this is slightly
    #  lower precision than an all-f32 path; exact for f32 inputs.)
    o1_ref[0] = jnp.dot(acc1.astype(v1b.dtype), v1b,
                        preferred_element_type=jnp.float32).astype(o1_ref.dtype)
    # weighted2 = (mean_h softmax_{S2})^T @ value2 with NO explicit transpose:
    # contract acc2's S2 axis (axis 0) against value2's S2 axis (axis 0).
    o2_ref[0] = lax.dot_general(acc2.astype(v2b.dtype), v2b,
                                (((0,), (0,)), ((), ())),
                                preferred_element_type=jnp.float32
                                ).astype(o2_ref.dtype)


def _vmem_limit_bytes(S1, S2, D1p, D2p, num_heads, d_kp, in_dtype, out_itemsize):
    in_b = jnp.dtype(in_dtype).itemsize
    est = 0
    est += 2 * (S1 * D1p + S2 * D2p) * in_b                 # double-buffered inputs
    est += 2 * (S2 * D1p + S1 * D2p) * out_itemsize         # double-buffered outputs
    est += 2 * (D1p + D2p) * num_heads * d_kp * in_b        # weights (conservatively x2)
    est += (S1 + S2) * num_heads * d_kp * 4                 # f32 q scratch
    est += 6 * S1 * S2 * 4                                  # scores / exp / accumulators
    try:
        cap = pltpu.get_tpu_info().vmem_capacity_bytes
    except Exception:
        cap = 64 << 20                                      # v7x per-TC floor
    limit = max(32 << 20, 2 * est)                          # headroom, >= default scoped
    return int(min(limit, int(cap * 0.9)))


def dense_coattn(value1, value2, w1, w2, num_heads):
    """Pallas DenseCoAttn forward (is_multi_head=False, dropout disabled).

    value1: (B, S1, D1), value2: (B, S2, D2)
    w1: (D1, dim), w2: (D2, dim) with dim = min(D1, D2)  (pre-transposed Linear weights)
    returns (weighted1 (B, S2, D1), weighted2 (B, S1, D2))
    """
    B, S1, D1 = value1.shape
    B2, S2, D2 = value2.shape
    assert B2 == B
    dim = w1.shape[1]
    assert w1.shape[0] == D1 and w2.shape == (D2, dim) and dim % num_heads == 0
    d_k = dim // num_heads
    out_dtype1, out_dtype2 = value1.dtype, value2.dtype

    # Lane-dense feature dims: pad D1/D2 up to multiples of 128 so the kernel's
    # loads and (especially) its output stores are full-vreg, unmasked ops.
    # Zero feature columns don't change q, the scores, or the softmax; they
    # only produce zero output columns that are sliced off below.
    D1p = _round_up(D1, 128)
    D2p = _round_up(D2, 128)
    if D1p != D1:
        value1 = jnp.pad(value1, ((0, 0), (0, 0), (0, D1p - D1)))
        w1 = jnp.pad(w1, ((0, D1p - D1), (0, 0)))
    if D2p != D2:
        value2 = jnp.pad(value2, ((0, 0), (0, 0), (0, D2p - D2)))
        w2 = jnp.pad(w2, ((0, D2p - D2), (0, 0)))

    # Pack heads into 128-lane-aligned slabs of ONE wide weight matrix per
    # modality: (D, dim) -> (D, num_heads * d_kp), head h in lanes
    # [h*d_kp, h*d_kp + d_k), zero fill elsewhere.  1/sqrt(d_k) folded into W1.
    d_kp = _round_up(d_k, 128)

    def pack_heads(w, scale=1.0):
        D = w.shape[0]
        wh = (w * scale).reshape(D, num_heads, d_k)
        if d_kp != d_k:
            wh = jnp.pad(wh, ((0, 0), (0, 0), (0, d_kp - d_k)))
        return wh.reshape(D, num_heads * d_kp)

    w1p = pack_heads(w1, scale=1.0 / sqrt(d_k)).astype(value1.dtype)
    w2p = pack_heads(w2).astype(value2.dtype)

    kernel = functools.partial(_dense_coattn_kernel,
                               num_heads=num_heads, d_kp=d_kp)

    vmem_limit = _vmem_limit_bytes(
        S1, S2, D1p, D2p, num_heads, d_kp, value1.dtype,
        max(jnp.dtype(out_dtype1).itemsize, jnp.dtype(out_dtype2).itemsize))

    out1p, out2p = pl.pallas_call(
        kernel,
        out_shape=(
            jax.ShapeDtypeStruct((B, S2, D1p), out_dtype1),
            jax.ShapeDtypeStruct((B, S1, D2p), out_dtype2),
        ),
        grid=(B,),   # batch as grid axis: bounds live ranges, feeds both TCs on v7x
        in_specs=[
            pl.BlockSpec((1, S1, D1p), lambda b: (b, 0, 0)),             # value1 block
            pl.BlockSpec((1, S2, D2p), lambda b: (b, 0, 0)),             # value2 block
            pl.BlockSpec((D1p, num_heads * d_kp), lambda b: (0, 0)),     # W1 (resident)
            pl.BlockSpec((D2p, num_heads * d_kp), lambda b: (0, 0)),     # W2 (resident)
        ],
        out_specs=(
            pl.BlockSpec((1, S2, D1p), lambda b: (b, 0, 0)),
            pl.BlockSpec((1, S1, D2p), lambda b: (b, 0, 0)),
        ),
        scratch_shapes=[
            pltpu.VMEM((S1, num_heads * d_kp), jnp.float32),   # q1 (head slabs)
            pltpu.VMEM((S2, num_heads * d_kp), jnp.float32),   # q2 (head slabs)
        ],
        compiler_params=pltpu.CompilerParams(
            dimension_semantics=("parallel",),
            vmem_limit_bytes=vmem_limit),
    )(value1, value2, w1p, w2p)

    return out1p[..., :D1], out2p[..., :D2]


def dense_coattn_ref(value1, value2, w1, w2, num_heads):
    """Pure-JAX reference mirroring the PyTorch forward."""
    B, S1, D1 = value1.shape
    _, S2, D2 = value2.shape
    dim = w1.shape[1]
    d_k = dim // num_heads
    q1 = (value1 @ w1).reshape(B, S1, num_heads, d_k).transpose(0, 2, 1, 3)  # (B,h,S1,dk)
    q2 = (value2 @ w2).reshape(B, S2, num_heads, d_k).transpose(0, 2, 1, 3)  # (B,h,S2,dk)
    sc1 = jnp.einsum('bhqd,bhkd->bhqk', q2, q1) / sqrt(d_k)                  # (B,h,S2,S1)
    sc2 = jnp.einsum('bhqd,bhkd->bhqk', q1, q2) / sqrt(d_k)                  # (B,h,S1,S2)
    p1 = jax.nn.softmax(sc1, axis=-1)
    p2 = jax.nn.softmax(sc2, axis=-1)
    weighted1 = jnp.einsum('bhqk,bkd->bhqd', p1, value1).mean(axis=1)        # (B,S2,D1)
    weighted2 = jnp.einsum('bhqk,bkd->bhqd', p2, value2).mean(axis=1)        # (B,S1,D2)
    return weighted1, weighted2


if __name__ == "__main__":
    # Small shapes consistent with the module: two modalities with different
    # feature dims; dim = min(D1, D2), num_attn heads.
    B, S1, S2 = 2, 16, 8
    D1, D2 = 32, 48
    NUM_ATTN = 4
    dim = min(D1, D2)

    key = jax.random.PRNGKey(0)
    k1, k2, k3, k4 = jax.random.split(key, 4)
    value1 = jax.random.normal(k1, (B, S1, D1), dtype=jnp.float32)
    value2 = jax.random.normal(k2, (B, S2, D2), dtype=jnp.float32)
    # nn.Linear(dim_in, dim, bias=False) weights, stored pre-transposed as (dim_in, dim).
    w1 = jax.random.normal(k3, (D1, dim), dtype=jnp.float32) / sqrt(D1)
    w2 = jax.random.normal(k4, (D2, dim), dtype=jnp.float32) / sqrt(D2)

    out1, out2 = dense_coattn(value1, value2, w1, w2, NUM_ATTN)
    jax.block_until_ready((out1, out2))

    ref1, ref2 = dense_coattn_ref(value1, value2, w1, w2, NUM_ATTN)
    assert out1.shape == (B, S2, D1) and out2.shape == (B, S1, D2)
    assert jnp.allclose(out1, ref1, atol=2e-3, rtol=2e-3), \
        float(jnp.max(jnp.abs(out1 - ref1)))
    assert jnp.allclose(out2, ref2, atol=2e-3, rtol=2e-3), \
        float(jnp.max(jnp.abs(out2 - ref2)))

    print("KERNEL_OK")
</pallas_src>

<mosaic_0001>
module attributes {stable_mosaic.version = 11 : i64} {
  func.func @_dense_coattn_kernel(%arg0: i32, %arg1: memref<1x16x128xf32, #tpu.memory_space<vmem>>, %arg2: memref<1x8x128xf32, #tpu.memory_space<vmem>>, %arg3: memref<128x512xf32, #tpu.memory_space<vmem>>, %arg4: memref<128x512xf32, #tpu.memory_space<vmem>>, %arg5: memref<1x8x128xf32, #tpu.memory_space<vmem>>, %arg6: memref<1x16x128xf32, #tpu.memory_space<vmem>>, %arg7: memref<16x512xf32, #tpu.memory_space<vmem>>, %arg8: memref<8x512xf32, #tpu.memory_space<vmem>>) attributes {dimension_semantics = [#tpu.dimension_semantics<parallel>], iteration_bounds = array<i64: 2>, scalar_prefetch = 0 : i64, scratch_operands = 2 : i64, tpu.core_type = #tpu.core_type<tc>, window_params = [{transform_indices = @transform_0, window_bounds = array<i64: 1, 16, 128>}, {transform_indices = @transform_1, window_bounds = array<i64: 1, 8, 128>}, {pipeline_mode = #tpu.pipeline_mode<synchronous>, transform_indices = @transform_2, window_bounds = array<i64: 128, 512>}, {pipeline_mode = #tpu.pipeline_mode<synchronous>, transform_indices = @transform_3, window_bounds = array<i64: 128, 512>}, {transform_indices = @transform_4, window_bounds = array<i64: 1, 8, 128>}, {transform_indices = @transform_5, window_bounds = array<i64: 1, 16, 128>}]} {
    %c0 = arith.constant 0 : index
    %c0_0 = arith.constant 0 : index
    %c0_1 = arith.constant 0 : index
    %0 = vector.load %arg1[%c0, %c0_0, %c0_1] : memref<1x16x128xf32, #tpu.memory_space<vmem>>, vector<1x16x128xf32>
    %1 = vector.shape_cast %0 : vector<1x16x128xf32> to vector<16x128xf32>
    %c0_2 = arith.constant 0 : index
    %c0_3 = arith.constant 0 : index
    %c0_4 = arith.constant 0 : index
    %2 = vector.load %arg2[%c0_2, %c0_3, %c0_4] : memref<1x8x128xf32, #tpu.memory_space<vmem>>, vector<1x8x128xf32>
    %3 = vector.shape_cast %2 : vector<1x8x128xf32> to vector<8x128xf32>
    %c0_5 = arith.constant 0 : index
    %c0_6 = arith.constant 0 : index
    %4 = vector.load %arg3[%c0_5, %c0_6] : memref<128x512xf32, #tpu.memory_space<vmem>>, vector<128x512xf32>
    %cst = arith.constant dense<0.000000e+00> : vector<16x512xf32>
    %5 = tpu.matmul %1, %4, %cst {dimension_numbers = #tpu.dot_dimension_numbers<[1], [0], [0], [1], [0, 0, 1, 1], [], []>} : vector<16x128xf32>, vector<128x512xf32>, vector<16x512xf32> -> vector<16x512xf32>
    %c0_7 = arith.constant 0 : index
    %c0_8 = arith.constant 0 : index
    %6 = vector.load %arg7[%c0_7, %c0_8] : memref<16x512xf32, #tpu.memory_space<vmem>>, vector<16x512xf32>
    tpu.vector_store %arg7[%c0_7, %c0_8], %5 {strides = array<i32>} : memref<16x512xf32, #tpu.memory_space<vmem>>, vector<16x512xf32>,
    %c0_9 = arith.constant 0 : index
    %c0_10 = arith.constant 0 : index
    %7 = vector.load %arg4[%c0_9, %c0_10] : memref<128x512xf32, #tpu.memory_space<vmem>>, vector<128x512xf32>
    %cst_11 = arith.constant dense<0.000000e+00> : vector<8x512xf32>
    %8 = tpu.matmul %3, %7, %cst_11 {dimension_numbers = #tpu.dot_dimension_numbers<[1], [0], [0], [1], [0, 0, 1, 1], [], []>} : vector<8x128xf32>, vector<128x512xf32>, vector<8x512xf32> -> vector<8x512xf32>
    %c0_12 = arith.constant 0 : index
    %c0_13 = arith.constant 0 : index
    %9 = vector.load %arg8[%c0_12, %c0_13] : memref<8x512xf32, #tpu.memory_space<vmem>>, vector<8x512xf32>
    tpu.vector_store %arg8[%c0_12, %c0_13], %8 {strides = array<i32>} : memref<8x512xf32, #tpu.memory_space<vmem>>, vector<8x512xf32>,
    %cst_14 = arith.constant 0.000000e+00 : f32
    %10 = vector.broadcast %cst_14 : f32 to vector<8x16xf32>
    %c0_i32 = arith.constant 0 : i32
    %c128_i32 = arith.constant 128 : i32
    %11 = arith.muli %c0_i32, %c128_i32 : i32
    %12 = tpu.assume_multiple %11, 128 : i32
    %c0_15 = arith.constant 0 : index
    %13 = arith.index_cast %12 : i32 to index
    %14 = vector.load %arg7[%c0_15, %13] : memref<16x512xf32, #tpu.memory_space<vmem>>, vector<16x128xf32>
    %c0_16 = arith.constant 0 : index
    %15 = arith.index_cast %12 : i32 to index
    %16 = vector.load %arg8[%c0_16, %15] : memref<8x512xf32, #tpu.memory_space<vmem>>, vector<8x128xf32>
    %cst_17 = arith.constant dense<0.000000e+00> : vector<8x16xf32>
    %17 = tpu.matmul %16, %14, %cst_17 {dimension_numbers = #tpu.dot_dimension_numbers<[1], [1], [0], [0], [0, 0, 1, 0], [], []>} : vector<8x128xf32>, vector<16x128xf32>, vector<8x16xf32> -> vector<8x16xf32>
    %18 = vector.shape_cast %17 : vector<8x16xf32> to vector<1x8x16xf32>
    %cst_18 = arith.constant dense<0xFF800000> : vector<1xf32>
    %19 = vector.multi_reduction <maximumf>, %18, %cst_18 [1, 2] : vector<1x8x16xf32> to vector<1xf32>
    %20 = vector.shape_cast %19 : vector<1xf32> to vector<1x1x1xf32>
    %21 = vector.extract %20[0, 0, 0] : f32 from vector<1x1x1xf32>
    %22 = vector.broadcast %21 : f32 to vector<1x1xf32>
    %23 = vector.broadcast %22 : vector<1x1xf32> to vector<8x16xf32>
    %24 = arith.subf %17, %23 : vector<8x16xf32>
    %25 = math.exp %24 : vector<8x16xf32>
    %cst_19 = arith.constant dense<0.000000e+00> : vector<8xf32>
    %26 = vector.multi_reduction <add>, %25, %cst_19 [1] : vector<8x16xf32> to vector<8xf32>
    %27 = vector.shape_cast %26 : vector<8xf32> to vector<8x1xf32>
    %cst_20 = arith.constant 4.000000e+00 : f32
    %28 = vector.broadcast %cst_20 : f32 to vector<8x1xf32>
    %29 = arith.mulf %27, %28 : vector<8x1xf32>
    %cst_21 = arith.constant dense<0.000000e+00> : vector<16xf32>
    %30 = vector.multi_reduction <add>, %25, %cst_21 [0] : vector<8x16xf32> to vector<16xf32>
    %31 = vector.shape_cast %30 : vector<16xf32> to vector<1x16xf32>
    %cst_22 = arith.constant 4.000000e+00 : f32
    %32 = vector.broadcast %cst_22 : f32 to vector<1x16xf32>
    %33 = arith.mulf %31, %32 : vector<1x16xf32>
    %34 = tpu.reciprocal %29 : vector<8x1xf32> -> vector<8x1xf32>
    %35 = vector.broadcast %34 : vector<8x1xf32> to vector<8x16xf32>
    %36 = arith.mulf %25, %35 : vector<8x16xf32>
    %37 = arith.addf %10, %36 : vector<8x16xf32>
    %38 = tpu.reciprocal %33 : vector<1x16xf32> -> vector<1x16xf32>
    %39 = vector.broadcast %38 : vector<1x16xf32> to vector<8x16xf32>
    %40 = arith.mulf %25, %39 : vector<8x16xf32>
    %41 = arith.addf %10, %40 : vector<8x16xf32>
    %c1_i32 = arith.constant 1 : i32
    %c128_i32_23 = arith.constant 128 : i32
    %42 = arith.muli %c1_i32, %c128_i32_23 : i32
    %43 = tpu.assume_multiple %42, 128 : i32
    %c0_24 = arith.constant 0 : index
    %44 = arith.index_cast %43 : i32 to index
    %45 = vector.load %arg7[%c0_24, %44] : memref<16x512xf32, #tpu.memory_space<vmem>>, vector<16x128xf32>
    %c0_25 = arith.constant 0 : index
    %46 = arith.index_cast %43 : i32 to index
    %47 = vector.load %arg8[%c0_25, %46] : memref<8x512xf32, #tpu.memory_space<vmem>>, vector<8x128xf32>
    %cst_26 = arith.constant dense<0.000000e+00> : vector<8x16xf32>
    %48 = tpu.matmul %47, %45, %cst_26 {dimension_numbers = #tpu.dot_dimension_numbers<[1], [1], [0], [0], [0, 0, 1, 0], [], []>} : vector<8x128xf32>, vector<16x128xf32>, vector<8x16xf32> -> vector<8x16xf32>
    %49 = vector.shape_cast %48 : vector<8x16xf32> to vector<1x8x16xf32>
    %cst_27 = arith.constant dense<0xFF800000> : vector<1xf32>
    %50 = vector.multi_reduction <maximumf>, %49, %cst_27 [1, 2] : vector<1x8x16xf32> to vector<1xf32>
    %51 = vector.shape_cast %50 : vector<1xf32> to vector<1x1x1xf32>
    %52 = vector.extract %51[0, 0, 0] : f32 from vector<1x1x1xf32>
    %53 = vector.broadcast %52 : f32 to vector<1x1xf32>
    %54 = vector.broadcast %53 : vector<1x1xf32> to vector<8x16xf32>
    %55 = arith.subf %48, %54 : vector<8x16xf32>
    %56 = math.exp %55 : vector<8x16xf32>
    %cst_28 = arith.constant dense<0.000000e+00> : vector<8xf32>
    %57 = vector.multi_reduction <add>, %56, %cst_28 [1] : vector<8x16xf32> to vector<8xf32>
    %58 = vector.shape_cast %57 : vector<8xf32> to vector<8x1xf32>
    %cst_29 = arith.constant 4.000000e+00 : f32
    %59 = vector.broadcast %cst_29 : f32 to vector<8x1xf32>
    %60 = arith.mulf %58, %59 : vector<8x1xf32>
    %cst_30 = arith.constant dense<0.000000e+00> : vector<16xf32>
    %61 = vector.multi_reduction <add>, %56, %cst_30 [0] : vector<8x16xf32> to vector<16xf32>
    %62 = vector.shape_cast %61 : vector<16xf32> to vector<1x16xf32>
    %cst_31 = arith.constant 4.000000e+00 : f32
    %63 = vector.broadcast %cst_31 : f32 to vector<1x16xf32>
    %64 = arith.mulf %62, %63 : vector<1x16xf32>
    %65 = tpu.reciprocal %60 : vector<8x1xf32> -> vector<8x1xf32>
    %66 = vector.broadcast %65 : vector<8x1xf32> to vector<8x16xf32>
    %67 = arith.mulf %56, %66 : vector<8x16xf32>
    %68 = arith.addf %37, %67 : vector<8x16xf32>
    %69 = tpu.reciprocal %64 : vector<1x16xf32> -> vector<1x16xf32>
    %70 = vector.broadcast %69 : vector<1x16xf32> to vector<8x16xf32>
    %71 = arith.mulf %56, %70 : vector<8x16xf32>
    %72 = arith.addf %41, %71 : vector<8x16xf32>
    %c2_i32 = arith.constant 2 : i32
    %c128_i32_32 = arith.constant 128 : i32
    %73 = arith.muli %c2_i32, %c128_i32_32 : i32
    %74 = tpu.assume_multiple %73, 128 : i32
    %c0_33 = arith.constant 0 : index
    %75 = arith.index_cast %74 : i32 to index
    %76 = vector.load %arg7[%c0_33, %75] : memref<16x512xf32, #tpu.memory_space<vmem>>, vector<16x128xf32>
    %c0_34 = arith.constant 0 : index
    %77 = arith.index_cast %74 : i32 to index
    %78 = vector.load %arg8[%c0_34, %77] : memref<8x512xf32, #tpu.memory_space<vmem>>, vector<8x128xf32>
    %cst_35 = arith.constant dense<0.000000e+00> : vector<8x16xf32>
    %79 = tpu.matmul %78, %76, %cst_35 {dimension_numbers = #tpu.dot_dimension_numbers<[1], [1], [0], [0], [0, 0, 1, 0], [], []>} : vector<8x128xf32>, vector<16x128xf32>, vector<8x16xf32> -> vector<8x16xf32>
    %80 = vector.shape_cast %79 : vector<8x16xf32> to vector<1x8x16xf32>
    %cst_36 = arith.constant dense<0xFF800000> : vector<1xf32>
    %81 = vector.multi_reduction <maximumf>, %80, %cst_36 [1, 2] : vector<1x8x16xf32> to vector<1xf32>
    %82 = vector.shape_cast %81 : vector<1xf32> to vector<1x1x1xf32>
    %83 = vector.extract %82[0, 0, 0] : f32 from vector<1x1x1xf32>
    %84 = vector.broadcast %83 : f32 to vector<1x1xf32>
    %85 = vector.broadcast %84 : vector<1x1xf32> to vector<8x16xf32>
    %86 = arith.subf %79, %85 : vector<8x16xf32>
    %87 = math.exp %86 : vector<8x16xf32>
    %cst_37 = arith.constant dense<0.000000e+00> : vector<8xf32>
    %88 = vector.multi_reduction <add>, %87, %cst_37 [1] : vector<8x16xf32> to vector<8xf32>
    %89 = vector.shape_cast %88 : vector<8xf32> to vector<8x1xf32>
    %cst_38 = arith.constant 4.000000e+00 : f32
    %90 = vector.broadcast %cst_38 : f32 to vector<8x1xf32>
    %91 = arith.mulf %89, %90 : vector<8x1xf32>
    %cst_39 = arith.constant dense<0.000000e+00> : vector<16xf32>
    %92 = vector.multi_reduction <add>, %87, %cst_39 [0] : vector<8x16xf32> to vector<16xf32>
    %93 = vector.shape_cast %92 : vector<16xf32> to vector<1x16xf32>
    %cst_40 = arith.constant 4.000000e+00 : f32
    %94 = vector.broadcast %cst_40 : f32 to vector<1x16xf32>
    %95 = arith.mulf %93, %94 : vector<1x16xf32>
    %96 = tpu.reciprocal %91 : vector<8x1xf32> -> vector<8x1xf32>
    %97 = vector.broadcast %96 : vector<8x1xf32> to vector<8x16xf32>
    %98 = arith.mulf %87, %97 : vector<8x16xf32>
    %99 = arith.addf %68, %98 : vector<8x16xf32>
    %100 = tpu.reciprocal %95 : vector<1x16xf32> -> vector<1x16xf32>
    %101 = vector.broadcast %100 : vector<1x16xf32> to vector<8x16xf32>
    %102 = arith.mulf %87, %101 : vector<8x16xf32>
    %103 = arith.addf %72, %102 : vector<8x16xf32>
    %c3_i32 = arith.constant 3 : i32
    %c128_i32_41 = arith.constant 128 : i32
    %104 = arith.muli %c3_i32, %c128_i32_41 : i32
    %105 = tpu.assume_multiple %104, 128 : i32
    %c0_42 = arith.constant 0 : index
    %106 = arith.index_cast %105 : i32 to index
    %107 = vector.load %arg7[%c0_42, %106] : memref<16x512xf32, #tpu.memory_space<vmem>>, vector<16x128xf32>
    %c0_43 = arith.constant 0 : index
    %108 = arith.index_cast %105 : i32 to index
    %109 = vector.load %arg8[%c0_43, %108] : memref<8x512xf32, #tpu.memory_space<vmem>>, vector<8x128xf32>
    %cst_44 = arith.constant dense<0.000000e+00> : vector<8x16xf32>
    %110 = tpu.matmul %109, %107, %cst_44 {dimension_numbers = #tpu.dot_dimension_numbers<[1], [1], [0], [0], [0, 0, 1, 0], [], []>} : vector<8x128xf32>, vector<16x128xf32>, vector<8x16xf32> -> vector<8x16xf32>
    %111 = vector.shape_cast %110 : vector<8x16xf32> to vector<1x8x16xf32>
    %cst_45 = arith.constant dense<0xFF800000> : vector<1xf32>
    %112 = vector.multi_reduction <maximumf>, %111, %cst_45 [1, 2] : vector<1x8x16xf32> to vector<1xf32>
    %113 = vector.shape_cast %112 : vector<1xf32> to vector<1x1x1xf32>
    %114 = vector.extract %113[0, 0, 0] : f32 from vector<1x1x1xf32>
    %115 = vector.broadcast %114 : f32 to vector<1x1xf32>
    %116 = vector.broadcast %115 : vector<1x1xf32> to vector<8x16xf32>
    %117 = arith.subf %110, %116 : vector<8x16xf32>
    %118 = math.exp %117 : vector<8x16xf32>
    %cst_46 = arith.constant dense<0.000000e+00> : vector<8xf32>
    %119 = vector.multi_reduction <add>, %118, %cst_46 [1] : vector<8x16xf32> to vector<8xf32>
    %120 = vector.shape_cast %119 : vector<8xf32> to vector<8x1xf32>
    %cst_47 = arith.constant 4.000000e+00 : f32
    %121 = vector.broadcast %cst_47 : f32 to vector<8x1xf32>
    %122 = arith.mulf %120, %121 : vector<8x1xf32>
    %cst_48 = arith.constant dense<0.000000e+00> : vector<16xf32>
    %123 = vector.multi_reduction <add>, %118, %cst_48 [0] : vector<8x16xf32> to vector<16xf32>
    %124 = vector.shape_cast %123 : vector<16xf32> to vector<1x16xf32>
    %cst_49 = arith.constant 4.000000e+00 : f32
    %125 = vector.broadcast %cst_49 : f32 to vector<1x16xf32>
    %126 = arith.mulf %124, %125 : vector<1x16xf32>
    %127 = tpu.reciprocal %122 : vector<8x1xf32> -> vector<8x1xf32>
    %128 = vector.broadcast %127 : vector<8x1xf32> to vector<8x16xf32>
    %129 = arith.mulf %118, %128 : vector<8x16xf32>
    %130 = arith.addf %99, %129 : vector<8x16xf32>
    %131 = tpu.reciprocal %126 : vector<1x16xf32> -> vector<1x16xf32>
    %132 = vector.broadcast %131 : vector<1x16xf32> to vector<8x16xf32>
    %133 = arith.mulf %118, %132 : vector<8x16xf32>
    %134 = arith.addf %103, %133 : vector<8x16xf32>
    %c4_i32 = arith.constant 4 : i32
    %cst_50 = arith.constant dense<0.000000e+00> : vector<8x128xf32>
    %135 = tpu.matmul %130, %1, %cst_50 {dimension_numbers = #tpu.dot_dimension_numbers<[1], [0], [0], [1], [0, 0, 1, 1], [], []>} : vector<8x16xf32>, vector<16x128xf32>, vector<8x128xf32> -> vector<8x128xf32>
    %c0_51 = arith.constant 0 : index
    %c0_52 = arith.constant 0 : index
    %c0_53 = arith.constant 0 : index
    %136 = vector.load %arg5[%c0_51, %c0_52, %c0_53] : memref<1x8x128xf32, #tpu.memory_space<vmem>>, vector<1x8x128xf32>
    %137 = vector.shape_cast %136 : vector<1x8x128xf32> to vector<8x128xf32>
    %138 = vector.shape_cast %135 : vector<8x128xf32> to vector<1x8x128xf32>
    tpu.vector_store %arg5[%c0_51, %c0_52, %c0_53], %138 {strides = array<i32>} : memref<1x8x128xf32, #tpu.memory_space<vmem>>, vector<1x8x128xf32>,
    %cst_54 = arith.constant dense<0.000000e+00> : vector<16x128xf32>
    %139 = tpu.matmul %134, %3, %cst_54 {dimension_numbers = #tpu.dot_dimension_numbers<[0], [0], [1], [1], [0, 1, 1, 1], [], []>} : vector<8x16xf32>, vector<8x128xf32>, vector<16x128xf32> -> vector<16x128xf32>
    %c0_55 = arith.constant 0 : index
    %c0_56 = arith.constant 0 : index
    %c0_57 = arith.constant 0 : index
    %140 = vector.load %arg6[%c0_55, %c0_56, %c0_57] : memref<1x16x128xf32, #tpu.memory_space<vmem>>, vector<1x16x128xf32>
    %141 = vector.shape_cast %140 : vector<1x16x128xf32> to vector<16x128xf32>
    %142 = vector.shape_cast %139 : vector<16x128xf32> to vector<1x16x128xf32>
    tpu.vector_store %arg6[%c0_55, %c0_56, %c0_57], %142 {strides = array<i32>} : memref<1x16x128xf32, #tpu.memory_space<vmem>>, vector<1x16x128xf32>,
    return
  }
  func.func @transform_0(%arg0: i32) -> (i32, i32, i32) {
    %c0_i32 = arith.constant 0 : i32
    %c0_i32_0 = arith.constant 0 : i32
    %c0_i32_1 = arith.constant 0 : i32
    return %arg0, %c0_i32, %c0_i32_0 : i32, i32, i32
  }
  func.func @transform_1(%arg0: i32) -> (i32, i32, i32) {
    %c0_i32 = arith.constant 0 : i32
    %c0_i32_0 = arith.constant 0 : i32
    %c0_i32_1 = arith.constant 0 : i32
    return %arg0, %c0_i32, %c0_i32_0 : i32, i32, i32
  }
  func.func @transform_2(%arg0: i32) -> (i32, i32) {
    %c0_i32 = arith.constant 0 : i32
    %c0_i32_0 = arith.constant 0 : i32
    %c0_i32_1 = arith.constant 0 : i32
    return %c0_i32, %c0_i32_0 : i32, i32
  }
  func.func @transform_3(%arg0: i32) -> (i32, i32) {
    %c0_i32 = arith.constant 0 : i32
    %c0_i32_0 = arith.constant 0 : i32
    %c0_i32_1 = arith.constant 0 : i32
    return %c0_i32, %c0_i32_0 : i32, i32
  }
  func.func @transform_4(%arg0: i32) -> (i32, i32, i32) {
    %c0_i32 = arith.constant 0 : i32
    %c0_i32_0 = arith.constant 0 : i32
    %c0_i32_1 = arith.constant 0 : i32
    return %arg0, %c0_i32, %c0_i32_0 : i32, i32, i32
  }
  func.func @transform_5(%arg0: i32) -> (i32, i32, i32) {
    %c0_i32 = arith.constant 0 : i32
    %c0_i32_0 = arith.constant 0 : i32
    %c0_i32_1 = arith.constant 0 : i32
    return %arg0, %c0_i32, %c0_i32_0 : i32, i32, i32
  }
}

</mosaic_0001>

<llo_original>
// kernel: tpu_custom_call.1
$region0: #{tpu_custom_call.1}
  #allocation0 [shape = 'u32[]', space=smem, size = 0x4, offset = 0x4, fixed_abs, tag = 'smem constant byte address 0x4 - core index']
  #allocation1 [shape = 'u32[144,128]{1,0:T(1,128)}', space=vmem, size = 0x12000, scoped, tag = 'internal scratch']
  #allocation2 [shape = 'f32[16,512]{1,0:T(8,128)}', space=vmem, size = 0x8000, scoped, tag = 'scratch operand']
  #allocation3 [shape = 'f32[8,512]{1,0:T(8,128)}', space=vmem, size = 0x4000, scoped, tag = 'scratch operand']
  %s0 = inlined_call_operand.hbm [shape: f32[2,16,128], index: 0, kind: input, shape index: {}]
  %s1 = inlined_call_operand.hbm [shape: f32[2,8,128], index: 1, kind: input, shape index: {}]
  %s2 = inlined_call_operand.hbm [shape: f32[128,512], index: 2, kind: input, shape index: {}]
  %s3 = inlined_call_operand.hbm [shape: f32[128,512], index: 3, kind: input, shape index: {}]
  %s4 = inlined_call_operand.hbm [shape: f32[2,8,128], index: 4, kind: output, shape index: {0}]
  %s5 = inlined_call_operand.hbm [shape: f32[2,16,128], index: 5, kind: output, shape index: {1}]
  %6 = xla_tuple %s4, %s5
  %s7 = sld [smem:[#allocation0]]
  $region73: #{tpu_custom_call.1} parent=0
    _
  %s9 = ssub.s32 1, %s7
  %s10 = scalar_select 0, %s9, %s7
  $region1: #{tpu_custom_call.1} parent=0
    #allocation4 [shape = 'u8[16384]{0}', space=vmem, size = 0x4000, scoped, tag = 'input window, operand 0']
    #allocation5 [shape = 's32[2]{0}', space=sflag, size = 0x8, scoped, tag = 'scoped memory for tpu_custom_call.1']
    #allocation6 [shape = 's32[2]{0}', space=sflag, size = 0x8, scoped, tag = 'scoped memory for tpu_custom_call.1']
    #allocation7 [shape = 'u8[8192]{0}', space=vmem, size = 0x2000, scoped, tag = 'input window, operand 1']
    #allocation8 [shape = 's32[2]{0}', space=sflag, size = 0x8, scoped, tag = 'scoped memory for tpu_custom_call.1']
    #allocation9 [shape = 'u8[262144]{0}', space=vmem, size = 0x40000, scoped, tag = 'input window, operand 2, single buffered']
    #allocation10 [shape = 'u8[262144]{0}', space=vmem, size = 0x40000, scoped, tag = 'input window, operand 3, single buffered']
    #allocation11 [shape = 's32[1]{0}', space=sflag, size = 0x4, scoped, tag = 'scoped memory for tpu_custom_call.1']
    #allocation12 [shape = 'u8[8192]{0}', space=vmem, size = 0x2000, scoped, tag = 'output window, operand 0']
    #allocation13 [shape = 'u8[16384]{0}', space=vmem, size = 0x4000, scoped, tag = 'output window, operand 1']
    #allocation14 [shape = 's32[2]{0}', space=sflag, size = 0x8, scoped, tag = 'scoped memory for tpu_custom_call.1']
    %11 = vsyncpa [#allocation5], 0
    %s12 = scalar_lea.sflag [#allocation5], 1
    %13 = vsyncpa %s12, 0
    %14 = vsyncpa [#allocation8], 0
    %s15 = scalar_lea.sflag [#allocation8], 1
    %16 = vsyncpa %s15, 0
    %17 = vsyncpa [#allocation11], 0
    %18 = vsyncpa [#allocation6], 0
    %s19 = scalar_lea.sflag [#allocation6], 1
    %20 = vsyncpa %s19, 0
    %21 = vsyncpa [#allocation14], 0
    %s22 = scalar_lea.sflag [#allocation14], 1
    %23 = vsyncpa %s22, 0
    loop: start=0, step=1, limit=4
    $region2: #{tpu_custom_call.1} parent=1 // loop_pre_header
      _
    $region3: #{tpu_custom_call.1} parent=1 // loop_header
      %s25 = sphi 0, %s29
      %p26 = scmp.ge.s32.totalorder %s25, 4
      %s35 = sphi 0, %s37
      %s38 = sphi 0, %s35
      %s39 = sphi 0, %s38
      %s55 = sphi 0, %s39
      %s61 = sphi 0, %s63
      %s64 = sphi 0, %s61
      %s65 = sphi 0, %s64
      %s81 = sphi 0, %s65
      %s85 = sphi 0, %s85
      %s87 = sphi 0, %s85
      %s88 = sphi 0, %s87
      %s102 = sphi 0, %s88
      %s106 = sphi 0, %s106
      %s108 = sphi 0, %s106
      %s109 = sphi 0, %s108
      %s123 = sphi 0, %s109
      %s129 = sphi 0, %s131
      %s132 = sphi 0, %s129
      %s133 = sphi 0, %s132
      %s149 = sphi 0, %s133
      %s155 = sphi 0, %s157
      %s158 = sphi 0, %s155
      %s159 = sphi 0, %s158
      %s175 = sphi 0, %s159
    $region4: #{tpu_custom_call.1} parent=1 // loop_header_branch
      %28 = sbr.rel (%p26) target = $region8
    $region5: #{tpu_custom_call.1} parent=1 // loop_body
      %s30 = ssub.s32 %s25, 1
      %s31 = ssub.s32 %s25, 2
      %s32 = sadd.s32 %s25, 1
      %s33 = ssub.s32 %s25, %s32
      %p34 = scmp.eq.s32.totalorder %s33, 0
      %s36 = sadd.s32 %s35, 1
      %s37 = scalar_select %p34, %s35, %s36
      %p40 = pneg %p34
      %p41 = scmp.eq.s32.totalorder %s25, 1
      %p42 = por %p40, %p41
      %p43 = scmp.ne.s32.totalorder %s35, %s38
      %p44 = scmp.eq.s32.totalorder %s25, 0
      %p45 = por %p43, %p44
      %p46 = scmp.ne.s32.totalorder %s35, %s38
      %p47 = scmp.eq.s32.totalorder %s30, 1
      %p48 = por %p46, %p47
      %p49 = scmp.ne.s32.totalorder %s38, %s39
      %p50 = scmp.eq.s32.totalorder %s30, 0
      %p51 = por %p49, %p50
      %p52 = scmp.ne.s32.totalorder %s38, %s39
      %p53 = scmp.eq.s32.totalorder %s31, 1
      %p54 = por %p52, %p53
      %p56 = scmp.ne.s32.totalorder %s39, %s55
      %p57 = scmp.eq.s32.totalorder %s31, 0
      %p58 = por %p56, %p57
      %s59 = ssub.s32 %s25, %s32
      %p60 = scmp.eq.s32.totalorder %s59, 0
      %s62 = sadd.s32 %s61, 1
      %s63 = scalar_select %p60, %s61, %s62
      %p66 = pneg %p60
      %p67 = scmp.eq.s32.totalorder %s25, 1
      %p68 = por %p66, %p67
      %p69 = scmp.ne.s32.totalorder %s61, %s64
      %p70 = scmp.eq.s32.totalorder %s25, 0
      %p71 = por %p69, %p70
      %p72 = scmp.ne.s32.totalorder %s61, %s64
      %p73 = scmp.eq.s32.totalorder %s30, 1
      %p74 = por %p72, %p73
      %p75 = scmp.ne.s32.totalorder %s64, %s65
      %p76 = scmp.eq.s32.totalorder %s30, 0
      %p77 = por %p75, %p76
      %p78 = scmp.ne.s32.totalorder %s64, %s65
      %p79 = scmp.eq.s32.totalorder %s31, 1
      %p80 = por %p78, %p79
      %p82 = scmp.ne.s32.totalorder %s65, %s81
      %p83 = scmp.eq.s32.totalorder %s31, 0
      %p84 = por %p82, %p83
      %s86 = sadd.s32 %s85, 1
      %p89 = scmp.eq.s32.totalorder %s25, 1
      %p90 = scmp.ne.s32.totalorder %s85, %s87
      %p91 = scmp.eq.s32.totalorder %s25, 0
      %p92 = por %p90, %p91
      %p93 = scmp.ne.s32.totalorder %s85, %s87
      %p94 = scmp.eq.s32.totalorder %s30, 1
      %p95 = por %p93, %p94
      %p96 = scmp.ne.s32.totalorder %s87, %s88
      %p97 = scmp.eq.s32.totalorder %s30, 0
      %p98 = por %p96, %p97
      %p99 = scmp.ne.s32.totalorder %s87, %s88
      %p100 = scmp.eq.s32.totalorder %s31, 1
      %p101 = por %p99, %p100
      %p103 = scmp.ne.s32.totalorder %s88, %s102
      %p104 = scmp.eq.s32.totalorder %s31, 0
      %p105 = por %p103, %p104
      %s107 = sadd.s32 %s106, 1
      %p110 = scmp.eq.s32.totalorder %s25, 1
      %p111 = scmp.ne.s32.totalorder %s106, %s108
      %p112 = scmp.eq.s32.totalorder %s25, 0
      %p113 = por %p111, %p112
      %p114 = scmp.ne.s32.totalorder %s106, %s108
      %p115 = scmp.eq.s32.totalorder %s30, 1
      %p116 = por %p114, %p115
      %p117 = scmp.ne.s32.totalorder %s108, %s109
      %p118 = scmp.eq.s32.totalorder %s30, 0
      %p119 = por %p117, %p118
      %p120 = scmp.ne.s32.totalorder %s108, %s109
      %p121 = scmp.eq.s32.totalorder %s31, 1
      %p122 = por %p120, %p121
      %p124 = scmp.ne.s32.totalorder %s109, %s123
      %p125 = scmp.eq.s32.totalorder %s31, 0
      %p126 = por %p124, %p125
      %s127 = ssub.s32 %s25, %s32
      %p128 = scmp.eq.s32.totalorder %s127, 0
      %s130 = sadd.s32 %s129, 1
      %s131 = scalar_select %p128, %s129, %s130
      %p134 = pneg %p128
      %p135 = scmp.eq.s32.totalorder %s25, 1
      %p136 = por %p134, %p135
      %p137 = scmp.ne.s32.totalorder %s129, %s132
      %p138 = scmp.eq.s32.totalorder %s25, 0
      %p139 = por %p137, %p138
      %p140 = scmp.ne.s32.totalorder %s129, %s132
      %p141 = scmp.eq.s32.totalorder %s30, 1
      %p142 = por %p140, %p141
      %p143 = scmp.ne.s32.totalorder %s132, %s133
      %p144 = scmp.eq.s32.totalorder %s30, 0
      %p145 = por %p143, %p144
      %p146 = scmp.ne.s32.totalorder %s132, %s133
      %p147 = scmp.eq.s32.totalorder %s31, 1
      %p148 = por %p146, %p147
      %p150 = scmp.ne.s32.totalorder %s133, %s149
      %p151 = scmp.eq.s32.totalorder %s31, 0
      %p152 = por %p150, %p151
      %s153 = ssub.s32 %s25, %s32
      %p154 = scmp.eq.s32.totalorder %s153, 0
      %s156 = sadd.s32 %s155, 1
      %s157 = scalar_select %p154, %s155, %s156
      %p160 = pneg %p154
      %p161 = scmp.eq.s32.totalorder %s25, 1
      %p162 = por %p160, %p161
      %p163 = scmp.ne.s32.totalorder %s155, %s158
      %p164 = scmp.eq.s32.totalorder %s25, 0
      %p165 = por %p163, %p164
      %p166 = scmp.ne.s32.totalorder %s155, %s158
      %p167 = scmp.eq.s32.totalorder %s30, 1
      %p168 = por %p166, %p167
      %p169 = scmp.ne.s32.totalorder %s158, %s159
      %p170 = scmp.eq.s32.totalorder %s30, 0
      %p171 = por %p169, %p170
      %p172 = scmp.ne.s32.totalorder %s158, %s159
      %p173 = scmp.eq.s32.totalorder %s31, 1
      %p174 = por %p172, %p173
      %p176 = scmp.ne.s32.totalorder %s159, %s175
      %p177 = scmp.eq.s32.totalorder %s31, 0
      %p178 = por %p176, %p177
      %p179 = scmp.le.s32.totalorder 1, %s25
      %p180 = scmp.lt.s32.totalorder %s25, 3
      %p181 = pnand %p179, %p180
      %p182 = pneg %p181
      // Predicated region
      $region9: #{tpu_custom_call.1} parent=5 // pred_check
        _
      $region10: #{tpu_custom_call.1} parent=5 // pred_check_branch
        %184 = sbr.rel (%p181) target = $region12
      $region11: #{tpu_custom_call.1} parent=5 // pred_region
        %s185 = ssub.s32 %s25, 1
        // Predicated region
        $region13: #{tpu_custom_call.1} parent=11 // pred_check
          %p186 = pneg %p98
        $region14: #{tpu_custom_call.1} parent=11 // pred_check_branch
          %188 = sbr.rel (%p186) target = $region16
        $region15: #{tpu_custom_call.1} parent=11 // pred_region
          %s190 = ssub.s32 8192, 8192
          %191 = vsyncadd [#allocation8], %s190
          %s192 = sshll.u32 [#allocation9], 4
          %s193 = int_to_ptr.vmem [resolvable:$true] %s192
          %198 = dma.hbm_to_vmem [thread:$0]  %s2, 8192, %s193, [#allocation8], 512, 512, 32
        $region16: #{tpu_custom_call.1} parent=11 // pred_fallthru
          _
        // Predicated region
        $region17: #{tpu_custom_call.1} parent=11 // pred_check
          %p199 = pneg %p119
        $region18: #{tpu_custom_call.1} parent=11 // pred_check_branch
          %201 = sbr.rel (%p199) target = $region20
        $region19: #{tpu_custom_call.1} parent=11 // pred_region
          %s203 = ssub.s32 8192, 8192
          %204 = vsyncadd [#allocation11], %s203
          %s205 = sshll.u32 [#allocation10], 4
          %s206 = int_to_ptr.vmem [resolvable:$true] %s205
          %211 = dma.hbm_to_vmem [thread:$0]  %s3, 8192, %s206, [#allocation11], 512, 512, 32
        $region20: #{tpu_custom_call.1} parent=11 // pred_fallthru
          _
      $region12: #{tpu_custom_call.1} parent=5 // pred_fallthru
        _
      %p212 = scmp.lt.s32.totalorder %s25, 2
      // Predicated region
      $region21: #{tpu_custom_call.1} parent=5 // pred_check
        %p213 = pneg %p212
      $region22: #{tpu_custom_call.1} parent=5 // pred_check_branch
        %215 = sbr.rel (%p213) target = $region24
      $region23: #{tpu_custom_call.1} parent=5 // pred_region
        // Predicated region
        $region25: #{tpu_custom_call.1} parent=23 // pred_check
          %p216 = pneg %p45
        $region26: #{tpu_custom_call.1} parent=23 // pred_check_branch
          %218 = sbr.rel (%p216) target = $region28
        $region27: #{tpu_custom_call.1} parent=23 // pred_region
          %s219 = sand.u32 %s35, 1
          %s220 = scalar_lea.sflag [#allocation5], %s219
          %s221 = sand.u32 %s35, 1
          %s222 = smul.addr %s221, 16
          %s223 = scalar_lea.vmem [#allocation4], %s222
          %s225 = ssub.s32 256, 256
          %226 = vsyncadd %s220, %s225
          %s227 = smul.addr %s25, 2
          %s228 = smul.addr %s227, 128
          %s229 = scalar_lea.hbm %s0, %s228
          %s230 = sshll.u32 %s223, 4
          %s231 = int_to_ptr.vmem [resolvable:$true] %s230
          %236 = dma.hbm_to_vmem [thread:$0]  %s229, 256, %s231, %s220, 128, 128, 8
        $region28: #{tpu_custom_call.1} parent=23 // pred_fallthru
          _
        // Predicated region
        $region29: #{tpu_custom_call.1} parent=23 // pred_check
          %p237 = pneg %p71
        $region30: #{tpu_custom_call.1} parent=23 // pred_check_branch
          %239 = sbr.rel (%p237) target = $region32
        $region31: #{tpu_custom_call.1} parent=23 // pred_region
          %s240 = sand.u32 %s25, 1
          %s241 = scalar_lea.sflag [#allocation8], %s240
          %s242 = sand.u32 %s61, 1
          %s243 = smul.addr %s242, 8
          %s244 = scalar_lea.vmem [#allocation7], %s243
          %s246 = ssub.s32 128, 128
          %247 = vsyncadd %s241, %s246
          %s248 = smul.addr %s25, 128
          %s249 = scalar_lea.hbm %s1, %s248
          %s251 = sshll.u32 %s244, 4
          %s252 = int_to_ptr.vmem [resolvable:$true] %s251
          %254 = dma.hbm_to_vmem [thread:$0]  %s249, 128, %s252, %s241
        $region32: #{tpu_custom_call.1} parent=23 // pred_fallthru
          _
      $region24: #{tpu_custom_call.1} parent=5 // pred_fallthru
        _
      %p255 = scmp.le.s32.totalorder 1, %s25
      %p256 = scmp.lt.s32.totalorder %s25, 3
      %p257 = pnand %p255, %p256
      %p258 = pneg %p257
      // Predicated region
      $region33: #{tpu_custom_call.1} parent=5 // pred_check
        _
      $region34: #{tpu_custom_call.1} parent=5 // pred_check_branch
        %260 = sbr.rel (%p257) target = $region36
      $region35: #{tpu_custom_call.1} parent=5 // pred_region
        %s261 = ssub.s32 %s25, 1
        %s262 = sand.u32 %s38, 1
        %s263 = scalar_lea.sflag [#allocation5], %s262
        %s264 = sand.u32 %s38, 1
        %s265 = smul.addr %s264, 16
        %s266 = scalar_lea.vmem [#allocation4], %s265
        // Predicated region
        $region37: #{tpu_custom_call.1} parent=35 // pred_check
          %p267 = pneg %p51
        $region38: #{tpu_custom_call.1} parent=35 // pred_check_branch
          %269 = sbr.rel (%p267) target = $region40
        $region39: #{tpu_custom_call.1} parent=35 // pred_region
          %270 = dma.done %s263, 256
        $region40: #{tpu_custom_call.1} parent=35 // pred_fallthru
          _
        %s271 = sand.u32 %s30, 1
        %s272 = scalar_lea.sflag [#allocation8], %s271
        %s273 = sand.u32 %s64, 1
        %s274 = smul.addr %s273, 8
        %s275 = scalar_lea.vmem [#allocation7], %s274
        // Predicated region
        $region41: #{tpu_custom_call.1} parent=35 // pred_check
          %p276 = pneg %p77
        $region42: #{tpu_custom_call.1} parent=35 // pred_check_branch
          %278 = sbr.rel (%p276) target = $region44
        $region43: #{tpu_custom_call.1} parent=35 // pred_region
          %279 = dma.done %s272, 128
        $region44: #{tpu_custom_call.1} parent=35 // pred_fallthru
          _
        // Predicated region
        $region45: #{tpu_custom_call.1} parent=35 // pred_check
          %p280 = pneg %p98
        $region46: #{tpu_custom_call.1} parent=35 // pred_check_branch
          %282 = sbr.rel (%p280) target = $region48
        $region47: #{tpu_custom_call.1} parent=35 // pred_region
          %283 = dma.done [#allocation8], 8192
        $region48: #{tpu_custom_call.1} parent=35 // pred_fallthru
          _
        // Predicated region
        $region49: #{tpu_custom_call.1} parent=35 // pred_check
          %p284 = pneg %p119
        $region50: #{tpu_custom_call.1} parent=35 // pred_check_branch
          %286 = sbr.rel (%p284) target = $region52
        $region51: #{tpu_custom_call.1} parent=35 // pred_region
          %287 = dma.done [#allocation11], 8192
        $region52: #{tpu_custom_call.1} parent=35 // pred_fallthru
          _
        %s288 = sand.u32 %s38, 1
        %s289 = scalar_lea.sflag [#allocation5], %s288
        %s290 = sand.u32 %s38, 1
        %s291 = smul.addr %s290, 16
        %s292 = scalar_lea.vmem [#allocation4], %s291
        %p293 = pneg %p51
        %p294 = pneg %p48
        %s295 = sand.u32 %s30, 1
        %s296 = scalar_lea.sflag [#allocation8], %s295
        %s297 = sand.u32 %s64, 1
        %s298 = smul.addr %s297, 8
        %s299 = scalar_lea.vmem [#allocation7], %s298
        %p300 = pneg %p77
        %p301 = pneg %p74
        %p302 = pneg %p98
        %p303 = pneg %p95
        %p304 = pneg %p119
        %p305 = pneg %p116
        %p306 = pneg %p145
        %p307 = pneg %p142
        %s308 = sand.u32 %s132, 1
        %s309 = scalar_lea.sflag [#allocation6], %s308
        %s310 = sand.u32 %s132, 1
        %s311 = smul.addr %s310, 8
        %s312 = scalar_lea.vmem [#allocation12], %s311
        %p313 = pneg %p171
        %p314 = pneg %p168
        %s315 = sand.u32 %s158, 1
        %s316 = scalar_lea.sflag [#allocation14], %s315
        %s317 = sand.u32 %s158, 1
        %s318 = smul.addr %s317, 16
        %s319 = scalar_lea.vmem [#allocation13], %s318
        %v320 = vld [vmem:[%s266] sm:$0xff]
        %v321 = vld [vmem:[%s266 + $0x8] sm:$0xff]
        %v322 = vld [vmem:[%s275] sm:$0xff]
        %v323 = vld [vmem:[#allocation9] sm:$0xff]
        %v324 = vld [vmem:[#allocation9 + $0x8] sm:$0xff]
        %v325 = vld [vmem:[#allocation9 + $0x10] sm:$0xff]
        %v326 = vld [vmem:[#allocation9 + $0x18] sm:$0xff]
        %v327 = vld [vmem:[#allocation9 + $0x20] sm:$0xff]
        %v328 = vld [vmem:[#allocation9 + $0x28] sm:$0xff]
        %v329 = vld [vmem:[#allocation9 + $0x30] sm:$0xff]
        %v330 = vld [vmem:[#allocation9 + $0x38] sm:$0xff]
        %v331 = vld [vmem:[#allocation9 + $0x40] sm:$0xff]
        %v332 = vld [vmem:[#allocation9 + $0x48] sm:$0xff]
        %v333 = vld [vmem:[#allocation9 + $0x50] sm:$0xff]
        %v334 = vld [vmem:[#allocation9 + $0x58] sm:$0xff]
        %v335 = vld [vmem:[#allocation9 + $0x60] sm:$0xff]
        %v336 = vld [vmem:[#allocation9 + $0x68] sm:$0xff]
        %v337 = vld [vmem:[#allocation9 + $0x70] sm:$0xff]
        %v338 = vld [vmem:[#allocation9 + $0x78] sm:$0xff]
        %v339 = vld [vmem:[#allocation9 + $0x80] sm:$0xff]
        %v340 = vld [vmem:[#allocation9 + $0x88] sm:$0xff]
        %v341 = vld [vmem:[#allocation9 + $0x90] sm:$0xff]
        %v342 = vld [vmem:[#allocation9 + $0x98] sm:$0xff]
        %v343 = vld [vmem:[#allocation9 + $0xa0] sm:$0xff]
        %v344 = vld [vmem:[#allocation9 + $0xa8] sm:$0xff]
        %v345 = vld [vmem:[#allocation9 + $0xb0] sm:$0xff]
        %v346 = vld [vmem:[#allocation9 + $0xb8] sm:$0xff]
        %v347 = vld [vmem:[#allocation9 + $0xc0] sm:$0xff]
        %v348 = vld [vmem:[#allocation9 + $0xc8] sm:$0xff]
        %v349 = vld [vmem:[#allocation9 + $0xd0] sm:$0xff]
        %v350 = vld [vmem:[#allocation9 + $0xd8] sm:$0xff]
        %v351 = vld [vmem:[#allocation9 + $0xe0] sm:$0xff]
        %v352 = vld [vmem:[#allocation9 + $0xe8] sm:$0xff]
        %v353 = vld [vmem:[#allocation9 + $0xf0] sm:$0xff]
        %v354 = vld [vmem:[#allocation9 + $0xf8] sm:$0xff]
        %v355 = vld [vmem:[#allocation9 + $0x100] sm:$0xff]
        %v356 = vld [vmem:[#allocation9 + $0x108] sm:$0xff]
        %v357 = vld [vmem:[#allocation9 + $0x110] sm:$0xff]
        %v358 = vld [vmem:[#allocation9 + $0x118] sm:$0xff]
        %v359 = vld [vmem:[#allocation9 + $0x120] sm:$0xff]
        %v360 = vld [vmem:[#allocation9 + $0x128] sm:$0xff]
        %v361 = vld [vmem:[#allocation9 + $0x130] sm:$0xff]
        %v362 = vld [vmem:[#allocation9 + $0x138] sm:$0xff]
        %v363 = vld [vmem:[#allocation9 + $0x140] sm:$0xff]
        %v364 = vld [vmem:[#allocation9 + $0x148] sm:$0xff]
        %v365 = vld [vmem:[#allocation9 + $0x150] sm:$0xff]
        %v366 = vld [vmem:[#allocation9 + $0x158] sm:$0xff]
        %v367 = vld [vmem:[#allocation9 + $0x160] sm:$0xff]
        %v368 = vld [vmem:[#allocation9 + $0x168] sm:$0xff]
        %v369 = vld [vmem:[#allocation9 + $0x170] sm:$0xff]
        %v370 = vld [vmem:[#allocation9 + $0x178] sm:$0xff]
        %v371 = vld [vmem:[#allocation9 + $0x180] sm:$0xff]
        %v372 = vld [vmem:[#allocation9 + $0x188] sm:$0xff]
        %v373 = vld [vmem:[#allocation9 + $0x190] sm:$0xff]
        %v374 = vld [vmem:[#allocation9 + $0x198] sm:$0xff]
        %v375 = vld [vmem:[#allocation9 + $0x1a0] sm:$0xff]
        %v376 = vld [vmem:[#allocation9 + $0x1a8] sm:$0xff]
        %v377 = vld [vmem:[#allocation9 + $0x1b0] sm:$0xff]
        %v378 = vld [vmem:[#allocation9 + $0x1b8] sm:$0xff]
        %v379 = vld [vmem:[#allocation9 + $0x1c0] sm:$0xff]
        %v380 = vld [vmem:[#allocation9 + $0x1c8] sm:$0xff]
        %v381 = vld [vmem:[#allocation9 + $0x1d0] sm:$0xff]
        %v382 = vld [vmem:[#allocation9 + $0x1d8] sm:$0xff]
        %v383 = vld [vmem:[#allocation9 + $0x1e0] sm:$0xff]
        %v384 = vld [vmem:[#allocation9 + $0x1e8] sm:$0xff]
        %v385 = vld [vmem:[#allocation9 + $0x1f0] sm:$0xff]
        %v386 = vld [vmem:[#allocation9 + $0x1f8] sm:$0xff]
        %387 = vmatprep.subr.mxu0 %v384
        %388 = vmatpush1.msra.mxu0 %v383
        %389 = vmatprep.subr.mxu0 %v380
        %390 = vmatpush1.msra.mxu0 %v379
        %391 = vmatprep.subr.mxu0 %v376
        %392 = vmatpush1.msra.mxu0 %v375
        %393 = vmatprep.subr.mxu0 %v372
        %394 = vmatpush1.msra.mxu0 %v371
        %395 = vmatprep.subr.mxu0 %v368
        %396 = vmatpush1.msra.mxu0 %v367
        %397 = vmatprep.subr.mxu0 %v364
        %398 = vmatpush1.msra.mxu0 %v363
        %399 = vmatprep.subr.mxu0 %v360
        %400 = vmatpush1.msra.mxu0 %v359
        %401 = vmatprep.subr.mxu0 %v356
        %402 = vmatpush1.msra.mxu0 %v355
        %403 = vmatprep.subr.mxu0 %v352
        %404 = vmatpush1.msra.mxu0 %v351
        %405 = vmatprep.subr.mxu0 %v348
        %406 = vmatpush1.msra.mxu0 %v347
        %407 = vmatprep.subr.mxu0 %v344
        %408 = vmatpush1.msra.mxu0 %v343
        %409 = vmatprep.subr.mxu0 %v340
        %410 = vmatpush1.msra.mxu0 %v339
        %411 = vmatprep.subr.mxu0 %v336
        %412 = vmatpush1.msra.mxu0 %v335
        %413 = vmatprep.subr.mxu0 %v332
        %414 = vmatpush1.msra.mxu0 %v331
        %415 = vmatprep.subr.mxu0 %v328
        %416 = vmatpush1.msra.mxu0 %v327
        %417 = vmatprep.subr.mxu0 %v324
        %418 = vmatpush1.msra.mxu0 %v323
        %419 = vmatprep.subr.mxu0 0.0
        %420 = vmatpush2.msra.mxu0 0.0
        %421 = vmatprep.subr.mxu0 0.0
        %422 = vmatpush2.msra.mxu0 0.0
        %423 = vmatprep.subr.mxu0 0.0
        %424 = vmatpush2.msra.mxu0 0.0
        %425 = vmatprep.subr.mxu0 0.0
        %426 = vmatpush2.msra.mxu0 0.0
        %427 = vmatprep.subr.mxu0 0.0
        %428 = vmatpush2.msra.mxu0 0.0
        %429 = vmatprep.subr.mxu0 0.0
        %430 = vmatpush2.msra.mxu0 0.0
        %431 = vmatprep.subr.mxu0 0.0
        %432 = vmatpush2.msra.mxu0 0.0
        %433 = vmatprep.subr.mxu0 0.0
        %434 = vmatpush2.msra.mxu0 0.0
        %435 = vmatprep.subr.mxu0 0.0
        %436 = vmatpush2.msra.mxu0 0.0
        %437 = vmatprep.subr.mxu0 0.0
        %438 = vmatpush2.msra.mxu0 0.0
        %439 = vmatprep.subr.mxu0 0.0
        %440 = vmatpush2.msra.mxu0 0.0
        %441 = vmatprep.subr.mxu0 0.0
        %442 = vmatpush2.msra.mxu0 0.0
        %443 = vmatprep.subr.mxu0 0.0
        %444 = vmatpush2.msra.mxu0 0.0
        %445 = vmatprep.subr.mxu0 0.0
        %446 = vmatpush2.msra.mxu0 0.0
        %447 = vmatprep.subr.mxu0 0.0
        %448 = vmatpush2.msra.mxu0 0.0
        %449 = vmatprep.subr.mxu0 0.0
        %450 = vmatpush2.msra.mxu0 0.0
        %451 = vmatprep.mubr.f32.mxu0 0.0
        %452 = vmatmul.mubr.f32.gmra.mxu0 %v320
        %v453 = vpop.f32.mrf.mxu0
        %v454 = vadd.f32 0.0, %v453
        %v455 = vpop.f32.mrf.mxu0
        %v456 = vadd.f32 0.0, %v455
        %457 = vmatprep.mubr.f32.mxu0 0.0
        %458 = vmatmul.mubr.f32.gmra.mxu0 %v321
        %v459 = vpop.f32.mrf.mxu0
        %v460 = vadd.f32 0.0, %v459
        %v461 = vpop.f32.mrf.mxu0
        %v462 = vadd.f32 0.0, %v461
        %463 = vdwg.mxu0
        %464 = vmatprep.subr.mxu0 %v386
        %465 = vmatpush1.msra.mxu0 %v385
        %466 = vmatprep.subr.mxu0 %v382
        %467 = vmatpush1.msra.mxu0 %v381
        %468 = vmatprep.subr.mxu0 %v378
        %469 = vmatpush1.msra.mxu0 %v377
        %470 = vmatprep.subr.mxu0 %v374
        %471 = vmatpush1.msra.mxu0 %v373
        %472 = vmatprep.subr.mxu0 %v370
        %473 = vmatpush1.msra.mxu0 %v369
        %474 = vmatprep.subr.mxu0 %v366
        %475 = vmatpush1.msra.mxu0 %v365
        %476 = vmatprep.subr.mxu0 %v362
        %477 = vmatpush1.msra.mxu0 %v361
        %478 = vmatprep.subr.mxu0 %v358
        %479 = vmatpush1.msra.mxu0 %v357
        %480 = vmatprep.subr.mxu0 %v354
        %481 = vmatpush1.msra.mxu0 %v353
        %482 = vmatprep.subr.mxu0 %v350
        %483 = vmatpush1.msra.mxu0 %v349
        %484 = vmatprep.subr.mxu0 %v346
        %485 = vmatpush1.msra.mxu0 %v345
        %486 = vmatprep.subr.mxu0 %v342
        %487 = vmatpush1.msra.mxu0 %v341
        %488 = vmatprep.subr.mxu0 %v338
        %489 = vmatpush1.msra.mxu0 %v337
        %490 = vmatprep.subr.mxu0 %v334
        %491 = vmatpush1.msra.mxu0 %v333
        %492 = vmatprep.subr.mxu0 %v330
        %493 = vmatpush1.msra.mxu0 %v329
        %494 = vmatprep.subr.mxu0 %v326
        %495 = vmatpush1.msra.mxu0 %v325
        %496 = vmatprep.subr.mxu0 0.0
        %497 = vmatpush2.msra.mxu0 0.0
        %498 = vmatprep.subr.mxu0 0.0
        %499 = vmatpush2.msra.mxu0 0.0
        %500 = vmatprep.subr.mxu0 0.0
        %501 = vmatpush2.msra.mxu0 0.0
        %502 = vmatprep.subr.mxu0 0.0
        %503 = vmatpush2.msra.mxu0 0.0
        %504 = vmatprep.subr.mxu0 0.0
        %505 = vmatpush2.msra.mxu0 0.0
        %506 = vmatprep.subr.mxu0 0.0
        %507 = vmatpush2.msra.mxu0 0.0
        %508 = vmatprep.subr.mxu0 0.0
        %509 = vmatpush2.msra.mxu0 0.0
        %510 = vmatprep.subr.mxu0 0.0
        %511 = vmatpush2.msra.mxu0 0.0
        %512 = vmatprep.subr.mxu0 0.0
        %513 = vmatpush2.msra.mxu0 0.0
        %514 = vmatprep.subr.mxu0 0.0
        %515 = vmatpush2.msra.mxu0 0.0
        %516 = vmatprep.subr.mxu0 0.0
        %517 = vmatpush2.msra.mxu0 0.0
        %518 = vmatprep.subr.mxu0 0.0
        %519 = vmatpush2.msra.mxu0 0.0
        %520 = vmatprep.subr.mxu0 0.0
        %521 = vmatpush2.msra.mxu0 0.0
        %522 = vmatprep.subr.mxu0 0.0
        %523 = vmatpush2.msra.mxu0 0.0
        %524 = vmatprep.subr.mxu0 0.0
        %525 = vmatpush2.msra.mxu0 0.0
        %526 = vmatprep.subr.mxu0 0.0
        %527 = vmatpush2.msra.mxu0 0.0
        %528 = vmatprep.mubr.f32.mxu0 0.0
        %529 = vmatmul.mubr.f32.gmra.mxu0 %v320
        %v530 = vpop.f32.mrf.mxu0
        %v531 = vadd.f32 0.0, %v530
        %v532 = vpop.f32.mrf.mxu0
        %v533 = vadd.f32 0.0, %v532
        %534 = vmatprep.mubr.f32.mxu0 0.0
        %535 = vmatmul.mubr.f32.gmra.mxu0 %v321
        %v536 = vpop.f32.mrf.mxu0
        %v537 = vadd.f32 0.0, %v536
        %v538 = vpop.f32.mrf.mxu0
        %v539 = vadd.f32 0.0, %v538
        %540 = vdwg.mxu0
        %541 = vst [vmem:[#allocation2] sm:$0xff] %v454
        %542 = vst [vmem:[#allocation2 + $0x8] sm:$0xff] %v456
        %543 = vst [vmem:[#allocation2 + $0x10] sm:$0xff] %v531
        %544 = vst [vmem:[#allocation2 + $0x18] sm:$0xff] %v533
        %545 = vst [vmem:[#allocation2 + $0x20] sm:$0xff] %v460
        %546 = vst [vmem:[#allocation2 + $0x28] sm:$0xff] %v462
        %547 = vst [vmem:[#allocation2 + $0x30] sm:$0xff] %v537
        %548 = vst [vmem:[#allocation2 + $0x38] sm:$0xff] %v539
        %v549 = vld [vmem:[#allocation10] sm:$0xff]
        %v550 = vld [vmem:[#allocation10 + $0x8] sm:$0xff]
        %v551 = vld [vmem:[#allocation10 + $0x10] sm:$0xff]
        %v552 = vld [vmem:[#allocation10 + $0x18] sm:$0xff]
        %v553 = vld [vmem:[#allocation10 + $0x20] sm:$0xff]
        %v554 = vld [vmem:[#allocation10 + $0x28] sm:$0xff]
        %v555 = vld [vmem:[#allocation10 + $0x30] sm:$0xff]
        %v556 = vld [vmem:[#allocation10 + $0x38] sm:$0xff]
        %v557 = vld [vmem:[#allocation10 + $0x40] sm:$0xff]
        %v558 = vld [vmem:[#allocation10 + $0x48] sm:$0xff]
        %v559 = vld [vmem:[#allocation10 + $0x50] sm:$0xff]
        %v560 = vld [vmem:[#allocation10 + $0x58] sm:$0xff]
        %v561 = vld [vmem:[#allocation10 + $0x60] sm:$0xff]
        %v562 = vld [vmem:[#allocation10 + $0x68] sm:$0xff]
        %v563 = vld [vmem:[#allocation10 + $0x70] sm:$0xff]
        %v564 = vld [vmem:[#allocation10 + $0x78] sm:$0xff]
        %v565 = vld [vmem:[#allocation10 + $0x80] sm:$0xff]
        %v566 = vld [vmem:[#allocation10 + $0x88] sm:$0xff]
        %v567 = vld [vmem:[#allocation10 + $0x90] sm:$0xff]
        %v568 = vld [vmem:[#allocation10 + $0x98] sm:$0xff]
        %v569 = vld [vmem:[#allocation10 + $0xa0] sm:$0xff]
        %v570 = vld [vmem:[#allocation10 + $0xa8] sm:$0xff]
        %v571 = vld [vmem:[#allocation10 + $0xb0] sm:$0xff]
        %v572 = vld [vmem:[#allocation10 + $0xb8] sm:$0xff]
        %v573 = vld [vmem:[#allocation10 + $0xc0] sm:$0xff]
        %v574 = vld [vmem:[#allocation10 + $0xc8] sm:$0xff]
        %v575 = vld [vmem:[#allocation10 + $0xd0] sm:$0xff]
        %v576 = vld [vmem:[#allocation10 + $0xd8] sm:$0xff]
        %v577 = vld [vmem:[#allocation10 + $0xe0] sm:$0xff]
        %v578 = vld [vmem:[#allocation10 + $0xe8] sm:$0xff]
        %v579 = vld [vmem:[#allocation10 + $0xf0] sm:$0xff]
        %v580 = vld [vmem:[#allocation10 + $0xf8] sm:$0xff]
        %v581 = vld [vmem:[#allocation10 + $0x100] sm:$0xff]
        %v582 = vld [vmem:[#allocation10 + $0x108] sm:$0xff]
        %v583 = vld [vmem:[#allocation10 + $0x110] sm:$0xff]
        %v584 = vld [vmem:[#allocation10 + $0x118] sm:$0xff]
        %v585 = vld [vmem:[#allocation10 + $0x120] sm:$0xff]
        %v586 = vld [vmem:[#allocation10 + $0x128] sm:$0xff]
        %v587 = vld [vmem:[#allocation10 + $0x130] sm:$0xff]
        %v588 = vld [vmem:[#allocation10 + $0x138] sm:$0xff]
        %v589 = vld [vmem:[#allocation10 + $0x140] sm:$0xff]
        %v590 = vld [vmem:[#allocation10 + $0x148] sm:$0xff]
        %v591 = vld [vmem:[#allocation10 + $0x150] sm:$0xff]
        %v592 = vld [vmem:[#allocation10 + $0x158] sm:$0xff]
        %v593 = vld [vmem:[#allocation10 + $0x160] sm:$0xff]
        %v594 = vld [vmem:[#allocation10 + $0x168] sm:$0xff]
        %v595 = vld [vmem:[#allocation10 + $0x170] sm:$0xff]
        %v596 = vld [vmem:[#allocation10 + $0x178] sm:$0xff]
        %v597 = vld [vmem:[#allocation10 + $0x180] sm:$0xff]
        %v598 = vld [vmem:[#allocation10 + $0x188] sm:$0xff]
        %v599 = vld [vmem:[#allocation10 + $0x190] sm:$0xff]
        %v600 = vld [vmem:[#allocation10 + $0x198] sm:$0xff]
        %v601 = vld [vmem:[#allocation10 + $0x1a0] sm:$0xff]
        %v602 = vld [vmem:[#allocation10 + $0x1a8] sm:$0xff]
        %v603 = vld [vmem:[#allocation10 + $0x1b0] sm:$0xff]
        %v604 = vld [vmem:[#allocation10 + $0x1b8] sm:$0xff]
        %v605 = vld [vmem:[#allocation10 + $0x1c0] sm:$0xff]
        %v606 = vld [vmem:[#allocation10 + $0x1c8] sm:$0xff]
        %v607 = vld [vmem:[#allocation10 + $0x1d0] sm:$0xff]
        %v608 = vld [vmem:[#allocation10 + $0x1d8] sm:$0xff]
        %v609 = vld [vmem:[#allocation10 + $0x1e0] sm:$0xff]
        %v610 = vld [vmem:[#allocation10 + $0x1e8] sm:$0xff]
        %v611 = vld [vmem:[#allocation10 + $0x1f0] sm:$0xff]
        %v612 = vld [vmem:[#allocation10 + $0x1f8] sm:$0xff]
        %613 = vmatprep.subr.mxu0 %v610
        %614 = vmatpush1.msra.mxu0 %v609
        %615 = vmatprep.subr.mxu0 %v606
        %616 = vmatpush1.msra.mxu0 %v605
        %617 = vmatprep.subr.mxu0 %v602
        %618 = vmatpush1.msra.mxu0 %v601
        %619 = vmatprep.subr.mxu0 %v598
        %620 = vmatpush1.msra.mxu0 %v597
        %621 = vmatprep.subr.mxu0 %v594
        %622 = vmatpush1.msra.mxu0 %v593
        %623 = vmatprep.subr.mxu0 %v590
        %624 = vmatpush1.msra.mxu0 %v589
        %625 = vmatprep.subr.mxu0 %v586
        %626 = vmatpush1.msra.mxu0 %v585
        %627 = vmatprep.subr.mxu0 %v582
        %628 = vmatpush1.msra.mxu0 %v581
        %629 = vmatprep.subr.mxu0 %v578
        %630 = vmatpush1.msra.mxu0 %v577
        %631 = vmatprep.subr.mxu0 %v574
        %632 = vmatpush1.msra.mxu0 %v573
        %633 = vmatprep.subr.mxu0 %v570
        %634 = vmatpush1.msra.mxu0 %v569
        %635 = vmatprep.subr.mxu0 %v566
        %636 = vmatpush1.msra.mxu0 %v565
        %637 = vmatprep.subr.mxu0 %v562
        %638 = vmatpush1.msra.mxu0 %v561
        %639 = vmatprep.subr.mxu0 %v558
        %640 = vmatpush1.msra.mxu0 %v557
        %641 = vmatprep.subr.mxu0 %v554
        %642 = vmatpush1.msra.mxu0 %v553
        %643 = vmatprep.subr.mxu0 %v550
        %644 = vmatpush1.msra.mxu0 %v549
        %645 = vmatprep.subr.mxu0 0.0
        %646 = vmatpush2.msra.mxu0 0.0
        %647 = vmatprep.subr.mxu0 0.0
        %648 = vmatpush2.msra.mxu0 0.0
        %649 = vmatprep.subr.mxu0 0.0
        %650 = vmatpush2.msra.mxu0 0.0
        %651 = vmatprep.subr.mxu0 0.0
        %652 = vmatpush2.msra.mxu0 0.0
        %653 = vmatprep.subr.mxu0 0.0
        %654 = vmatpush2.msra.mxu0 0.0
        %655 = vmatprep.subr.mxu0 0.0
        %656 = vmatpush2.msra.mxu0 0.0
        %657 = vmatprep.subr.mxu0 0.0
        %658 = vmatpush2.msra.mxu0 0.0
        %659 = vmatprep.subr.mxu0 0.0
        %660 = vmatpush2.msra.mxu0 0.0
        %661 = vmatprep.subr.mxu0 0.0
        %662 = vmatpush2.msra.mxu0 0.0
        %663 = vmatprep.subr.mxu0 0.0
        %664 = vmatpush2.msra.mxu0 0.0
        %665 = vmatprep.subr.mxu0 0.0
        %666 = vmatpush2.msra.mxu0 0.0
        %667 = vmatprep.subr.mxu0 0.0
        %668 = vmatpush2.msra.mxu0 0.0
        %669 = vmatprep.subr.mxu0 0.0
        %670 = vmatpush2.msra.mxu0 0.0
        %671 = vmatprep.subr.mxu0 0.0
        %672 = vmatpush2.msra.mxu0 0.0
        %673 = vmatprep.subr.mxu0 0.0
        %674 = vmatpush2.msra.mxu0 0.0
        %675 = vmatprep.subr.mxu0 0.0
        %676 = vmatpush2.msra.mxu0 0.0
        %677 = vmatprep.mubr.f32.mxu0 0.0
        %678 = vmatmul.mubr.f32.gmra.mxu0 %v322
        %v679 = vpop.f32.mrf.mxu0
        %v680 = vadd.f32 0.0, %v679
        %v681 = vpop.f32.mrf.mxu0
        %v682 = vadd.f32 0.0, %v681
        %683 = vdwg.mxu0
        %684 = vmatprep.subr.mxu0 %v612
        %685 = vmatpush1.msra.mxu0 %v611
        %686 = vmatprep.subr.mxu0 %v608
        %687 = vmatpush1.msra.mxu0 %v607
        %688 = vmatprep.subr.mxu0 %v604
        %689 = vmatpush1.msra.mxu0 %v603
        %690 = vmatprep.subr.mxu0 %v600
        %691 = vmatpush1.msra.mxu0 %v599
        %692 = vmatprep.subr.mxu0 %v596
        %693 = vmatpush1.msra.mxu0 %v595
        %694 = vmatprep.subr.mxu0 %v592
        %695 = vmatpush1.msra.mxu0 %v591
        %696 = vmatprep.subr.mxu0 %v588
        %697 = vmatpush1.msra.mxu0 %v587
        %698 = vmatprep.subr.mxu0 %v584
        %699 = vmatpush1.msra.mxu0 %v583
        %700 = vmatprep.subr.mxu0 %v580
        %701 = vmatpush1.msra.mxu0 %v579
        %702 = vmatprep.subr.mxu0 %v576
        %703 = vmatpush1.msra.mxu0 %v575
        %704 = vmatprep.subr.mxu0 %v572
        %705 = vmatpush1.msra.mxu0 %v571
        %706 = vmatprep.subr.mxu0 %v568
        %707 = vmatpush1.msra.mxu0 %v567
        %708 = vmatprep.subr.mxu0 %v564
        %709 = vmatpush1.msra.mxu0 %v563
        %710 = vmatprep.subr.mxu0 %v560
        %711 = vmatpush1.msra.mxu0 %v559
        %712 = vmatprep.subr.mxu0 %v556
        %713 = vmatpush1.msra.mxu0 %v555
        %714 = vmatprep.subr.mxu0 %v552
        %715 = vmatpush1.msra.mxu0 %v551
        %716 = vmatprep.subr.mxu0 0.0
        %717 = vmatpush2.msra.mxu0 0.0
        %718 = vmatprep.subr.mxu0 0.0
        %719 = vmatpush2.msra.mxu0 0.0
        %720 = vmatprep.subr.mxu0 0.0
        %721 = vmatpush2.msra.mxu0 0.0
        %722 = vmatprep.subr.mxu0 0.0
        %723 = vmatpush2.msra.mxu0 0.0
        %724 = vmatprep.subr.mxu0 0.0
        %725 = vmatpush2.msra.mxu0 0.0
        %726 = vmatprep.subr.mxu0 0.0
        %727 = vmatpush2.msra.mxu0 0.0
        %728 = vmatprep.subr.mxu0 0.0
        %729 = vmatpush2.msra.mxu0 0.0
        %730 = vmatprep.subr.mxu0 0.0
        %731 = vmatpush2.msra.mxu0 0.0
        %732 = vmatprep.subr.mxu0 0.0
        %733 = vmatpush2.msra.mxu0 0.0
        %734 = vmatprep.subr.mxu0 0.0
        %735 = vmatpush2.msra.mxu0 0.0
        %736 = vmatprep.subr.mxu0 0.0
        %737 = vmatpush2.msra.mxu0 0.0
        %738 = vmatprep.subr.mxu0 0.0
        %739 = vmatpush2.msra.mxu0 0.0
        %740 = vmatprep.subr.mxu0 0.0
        %741 = vmatpush2.msra.mxu0 0.0
        %742 = vmatprep.subr.mxu0 0.0
        %743 = vmatpush2.msra.mxu0 0.0
        %744 = vmatprep.subr.mxu0 0.0
        %745 = vmatpush2.msra.mxu0 0.0
        %746 = vmatprep.subr.mxu0 0.0
        %747 = vmatpush2.msra.mxu0 0.0
        %748 = vmatprep.mubr.f32.mxu0 0.0
        %749 = vmatmul.mubr.f32.gmra.mxu0 %v322
        %v750 = vpop.f32.mrf.mxu0
        %v751 = vadd.f32 0.0, %v750
        %v752 = vpop.f32.mrf.mxu0
        %v753 = vadd.f32 0.0, %v752
        %754 = vdwg.mxu0
        %755 = vst [vmem:[#allocation3] sm:$0xff] %v680
        %756 = vst [vmem:[#allocation3 + $0x8] sm:$0xff] %v682
        %757 = vst [vmem:[#allocation3 + $0x10] sm:$0xff] %v751
        %758 = vst [vmem:[#allocation3 + $0x18] sm:$0xff] %v753
        %v759 = vld [vmem:[#allocation2] sm:$0xff]
        %v760 = vld [vmem:[#allocation2 + $0x20] sm:$0xff]
        %v761 = vld [vmem:[#allocation3] sm:$0xff]
        %762 = vmatprep.subr.mxu0 0.0
        %763 = vmatpush1.xpose.msra.mxu0 0.0
        %764 = vmatprep.subr.mxu0 0.0
        %765 = vmatpush1.xpose.msra.mxu0 0.0
        %766 = vmatprep.subr.mxu0 0.0
        %767 = vmatpush1.xpose.msra.mxu0 0.0
        %768 = vmatprep.subr.mxu0 0.0
        %769 = vmatpush1.xpose.msra.mxu0 0.0
        %770 = vmatprep.subr.mxu0 0.0
        %771 = vmatpush1.xpose.msra.mxu0 0.0
        %772 = vmatprep.subr.mxu0 0.0
        %773 = vmatpush1.xpose.msra.mxu0 0.0
        %774 = vmatprep.subr.mxu0 0.0
        %775 = vmatpush1.xpose.msra.mxu0 0.0
        %776 = vmatprep.subr.mxu0 0.0
        %777 = vmatpush1.xpose.msra.mxu0 0.0
        %778 = vmatprep.subr.mxu0 0.0
        %779 = vmatpush1.xpose.msra.mxu0 0.0
        %780 = vmatprep.subr.mxu0 0.0
        %781 = vmatpush1.xpose.msra.mxu0 0.0
        %782 = vmatprep.subr.mxu0 0.0
        %783 = vmatpush1.xpose.msra.mxu0 0.0
        %784 = vmatprep.subr.mxu0 0.0
        %785 = vmatpush1.xpose.msra.mxu0 0.0
        %786 = vmatprep.subr.mxu0 0.0
        %787 = vmatpush1.xpose.msra.mxu0 0.0
        %788 = vmatprep.subr.mxu0 0.0
        %789 = vmatpush1.xpose.msra.mxu0 0.0
        %790 = vmatprep.subr.mxu0 0.0
        %791 = vmatpush1.xpose.msra.mxu0 %v760
        %792 = vmatprep.subr.mxu0 0.0
        %793 = vmatpush1.xpose.msra.mxu0 %v759
        %794 = vmatprep.subr.mxu0 0.0
        %795 = vmatpush2.xpose.msra.mxu0 0.0
        %796 = vmatprep.subr.mxu0 0.0
        %797 = vmatpush2.xpose.msra.mxu0 0.0
        %798 = vmatprep.subr.mxu0 0.0
        %799 = vmatpush2.xpose.msra.mxu0 0.0
        %800 = vmatprep.subr.mxu0 0.0
        %801 = vmatpush2.xpose.msra.mxu0 0.0
        %802 = vmatprep.subr.mxu0 0.0
        %803 = vmatpush2.xpose.msra.mxu0 0.0
        %804 = vmatprep.subr.mxu0 0.0
        %805 = vmatpush2.xpose.msra.mxu0 0.0
        %806 = vmatprep.subr.mxu0 0.0
        %807 = vmatpush2.xpose.msra.mxu0 0.0
        %808 = vmatprep.subr.mxu0 0.0
        %809 = vmatpush2.xpose.msra.mxu0 0.0
        %810 = vmatprep.subr.mxu0 0.0
        %811 = vmatpush2.xpose.msra.mxu0 0.0
        %812 = vmatprep.subr.mxu0 0.0
        %813 = vmatpush2.xpose.msra.mxu0 0.0
        %814 = vmatprep.subr.mxu0 0.0
        %815 = vmatpush2.xpose.msra.mxu0 0.0
        %816 = vmatprep.subr.mxu0 0.0
        %817 = vmatpush2.xpose.msra.mxu0 0.0
        %818 = vmatprep.subr.mxu0 0.0
        %819 = vmatpush2.xpose.msra.mxu0 0.0
        %820 = vmatprep.subr.mxu0 0.0
        %821 = vmatpush2.xpose.msra.mxu0 0.0
        %822 = vmatprep.subr.mxu0 0.0
        %823 = vmatpush2.xpose.msra.mxu0 0.0
        %824 = vmatprep.subr.mxu0 0.0
        %825 = vmatpush2.xpose.msra.mxu0 0.0
        %826 = vmatprep.mubr.f32.mxu0 0.0
        %827 = vmatmul.mubr.f32.gmra.mxu0 %v761
        %v828 = vpop.f32.mrf.mxu0
        %v829 = vadd.f32 0.0, %v828
        %v830 = vpop.f32.mrf.mxu0
        %831 = vdwg.mxu0
        %vm832 = vcmask 130048
        %v833 = vsel %vm832, %v829, -inf
        %834 = vmax.xlane.f32.xlu0 %v833
        %v835 = vpop.xlane.xlu0 %834
        %v836 = vrot.slane %v835, 4
        %v837 = vmax.f32 %v835, %v836
        %v838 = vrot.slane %v837, 2
        %v839 = vmax.f32 %v837, %v838
        %v840 = vrot.slane %v839, 1
        %v841 = vmax.f32 %v839, %v840
        %s842 = vtos %v841
        %v843 = vstv %s842
        %v844 = vsub.f32 %v829, %v843
        %v845 = vmul.f32 %v844, 1.442695
        %v846 = vpow.pop %v845
        %v847 = vsel %vm832, %v846, 0.0
        %848 = vadd.xlane.f32.xlu0 %v847
        %v849 = vpop.xlane.xlu0 %848
        %v850 = vmul.f32 %v849, 4.0
        %v851 = vrot.slane %v847, 4
        %v852 = vadd.f32 %v847, %v851
        %v853 = vrot.slane %v852, 2
        %v854 = vadd.f32 %v852, %v853
        %v855 = vrot.slane %v854, 1
        %v856 = vadd.f32 %v854, %v855
        %v857 = vmul.f32 %v856, 4.0
        %v858 = vrcp.pop %v850
        %v859 = vmul.f32 %v846, %v858
        %v860 = vadd.f32 %v859, 0.0
        %v861 = vrcp.pop %v857
        %v862 = vmul.f32 %v846, %v861
        %v863 = vadd.f32 %v862, 0.0
        %s864 = scalar_lea.vmem [#allocation2], 8
        %v865 = vld [vmem:[%s864] sm:$0xff]
        %v866 = vld [vmem:[%s864 + $0x20] sm:$0xff]
        %s867 = scalar_lea.vmem [#allocation3], 8
        %v868 = vld [vmem:[%s867] sm:$0xff]
        %869 = vmatprep.subr.mxu0 0.0
        %870 = vmatpush1.xpose.msra.mxu0 0.0
        %871 = vmatprep.subr.mxu0 0.0
        %872 = vmatpush1.xpose.msra.mxu0 0.0
        %873 = vmatprep.subr.mxu0 0.0
        %874 = vmatpush1.xpose.msra.mxu0 0.0
        %875 = vmatprep.subr.mxu0 0.0
        %876 = vmatpush1.xpose.msra.mxu0 0.0
        %877 = vmatprep.subr.mxu0 0.0
        %878 = vmatpush1.xpose.msra.mxu0 0.0
        %879 = vmatprep.subr.mxu0 0.0
        %880 = vmatpush1.xpose.msra.mxu0 0.0
        %881 = vmatprep.subr.mxu0 0.0
        %882 = vmatpush1.xpose.msra.mxu0 0.0
        %883 = vmatprep.subr.mxu0 0.0
        %884 = vmatpush1.xpose.msra.mxu0 0.0
        %885 = vmatprep.subr.mxu0 0.0
        %886 = vmatpush1.xpose.msra.mxu0 0.0
        %887 = vmatprep.subr.mxu0 0.0
        %888 = vmatpush1.xpose.msra.mxu0 0.0
        %889 = vmatprep.subr.mxu0 0.0
        %890 = vmatpush1.xpose.msra.mxu0 0.0
        %891 = vmatprep.subr.mxu0 0.0
        %892 = vmatpush1.xpose.msra.mxu0 0.0
        %893 = vmatprep.subr.mxu0 0.0
        %894 = vmatpush1.xpose.msra.mxu0 0.0
        %895 = vmatprep.subr.mxu0 0.0
        %896 = vmatpush1.xpose.msra.mxu0 0.0
        %897 = vmatprep.subr.mxu0 0.0
        %898 = vmatpush1.xpose.msra.mxu0 %v866
        %899 = vmatprep.subr.mxu0 0.0
        %900 = vmatpush1.xpose.msra.mxu0 %v865
        %901 = vmatprep.subr.mxu0 0.0
        %902 = vmatpush2.xpose.msra.mxu0 0.0
        %903 = vmatprep.subr.mxu0 0.0
        %904 = vmatpush2.xpose.msra.mxu0 0.0
        %905 = vmatprep.subr.mxu0 0.0
        %906 = vmatpush2.xpose.msra.mxu0 0.0
        %907 = vmatprep.subr.mxu0 0.0
        %908 = vmatpush2.xpose.msra.mxu0 0.0
        %909 = vmatprep.subr.mxu0 0.0
        %910 = vmatpush2.xpose.msra.mxu0 0.0
        %911 = vmatprep.subr.mxu0 0.0
        %912 = vmatpush2.xpose.msra.mxu0 0.0
        %913 = vmatprep.subr.mxu0 0.0
        %914 = vmatpush2.xpose.msra.mxu0 0.0
        %915 = vmatprep.subr.mxu0 0.0
        %916 = vmatpush2.xpose.msra.mxu0 0.0
        %917 = vmatprep.subr.mxu0 0.0
        %918 = vmatpush2.xpose.msra.mxu0 0.0
        %919 = vmatprep.subr.mxu0 0.0
        %920 = vmatpush2.xpose.msra.mxu0 0.0
        %921 = vmatprep.subr.mxu0 0.0
        %922 = vmatpush2.xpose.msra.mxu0 0.0
        %923 = vmatprep.subr.mxu0 0.0
        %924 = vmatpush2.xpose.msra.mxu0 0.0
        %925 = vmatprep.subr.mxu0 0.0
        %926 = vmatpush2.xpose.msra.mxu0 0.0
        %927 = vmatprep.subr.mxu0 0.0
        %928 = vmatpush2.xpose.msra.mxu0 0.0
        %929 = vmatprep.subr.mxu0 0.0
        %930 = vmatpush2.xpose.msra.mxu0 0.0
        %931 = vmatprep.subr.mxu0 0.0
        %932 = vmatpush2.xpose.msra.mxu0 0.0
        %933 = vmatprep.mubr.f32.mxu0 0.0
        %934 = vmatmul.mubr.f32.gmra.mxu0 %v868
        %v935 = vpop.f32.mrf.mxu0
        %v936 = vadd.f32 0.0, %v935
        %v937 = vpop.f32.mrf.mxu0
        %938 = vdwg.mxu0
        %v939 = vsel %vm832, %v936, -inf
        %940 = vmax.xlane.f32.xlu0 %v939
        %v941 = vpop.xlane.xlu0 %940
        %v942 = vrot.slane %v941, 4
        %v943 = vmax.f32 %v941, %v942
        %v944 = vrot.slane %v943, 2
        %v945 = vmax.f32 %v943, %v944
        %v946 = vrot.slane %v945, 1
        %v947 = vmax.f32 %v945, %v946
        %s948 = vtos %v947
        %v949 = vstv %s948
        %v950 = vsub.f32 %v936, %v949
        %v951 = vmul.f32 %v950, 1.442695
        %v952 = vpow.pop %v951
        %v953 = vsel %vm832, %v952, 0.0
        %954 = vadd.xlane.f32.xlu0 %v953
        %v955 = vpop.xlane.xlu0 %954
        %v956 = vmul.f32 %v955, 4.0
        %v957 = vrot.slane %v953, 4
        %v958 = vadd.f32 %v953, %v957
        %v959 = vrot.slane %v958, 2
        %v960 = vadd.f32 %v958, %v959
        %v961 = vrot.slane %v960, 1
        %v962 = vadd.f32 %v960, %v961
        %v963 = vmul.f32 %v962, 4.0
        %v964 = vrcp.pop %v956
        %v965 = vmul.f32 %v952, %v964
        %v966 = vadd.f32 %v860, %v965
        %v967 = vrcp.pop %v963
        %v968 = vmul.f32 %v952, %v967
        %v969 = vadd.f32 %v863, %v968
        %s970 = scalar_lea.vmem [#allocation2], 16
        %v971 = vld [vmem:[%s970] sm:$0xff]
        %v972 = vld [vmem:[%s970 + $0x20] sm:$0xff]
        %s973 = scalar_lea.vmem [#allocation3], 16
        %v974 = vld [vmem:[%s973] sm:$0xff]
        %975 = vmatprep.subr.mxu0 0.0
        %976 = vmatpush1.xpose.msra.mxu0 0.0
        %977 = vmatprep.subr.mxu0 0.0
        %978 = vmatpush1.xpose.msra.mxu0 0.0
        %979 = vmatprep.subr.mxu0 0.0
        %980 = vmatpush1.xpose.msra.mxu0 0.0
        %981 = vmatprep.subr.mxu0 0.0
        %982 = vmatpush1.xpose.msra.mxu0 0.0
        %983 = vmatprep.subr.mxu0 0.0
        %984 = vmatpush1.xpose.msra.mxu0 0.0
        %985 = vmatprep.subr.mxu0 0.0
        %986 = vmatpush1.xpose.msra.mxu0 0.0
        %987 = vmatprep.subr.mxu0 0.0
        %988 = vmatpush1.xpose.msra.mxu0 0.0
        %989 = vmatprep.subr.mxu0 0.0
        %990 = vmatpush1.xpose.msra.mxu0 0.0
        %991 = vmatprep.subr.mxu0 0.0
        %992 = vmatpush1.xpose.msra.mxu0 0.0
        %993 = vmatprep.subr.mxu0 0.0
        %994 = vmatpush1.xpose.msra.mxu0 0.0
        %995 = vmatprep.subr.mxu0 0.0
        %996 = vmatpush1.xpose.msra.mxu0 0.0
        %997 = vmatprep.subr.mxu0 0.0
        %998 = vmatpush1.xpose.msra.mxu0 0.0
        %999 = vmatprep.subr.mxu0 0.0
        %1000 = vmatpush1.xpose.msra.mxu0 0.0
        %1001 = vmatprep.subr.mxu0 0.0
        %1002 = vmatpush1.xpose.msra.mxu0 0.0
        %1003 = vmatprep.subr.mxu0 0.0
        %1004 = vmatpush1.xpose.msra.mxu0 %v972
        %1005 = vmatprep.subr.mxu0 0.0
        %1006 = vmatpush1.xpose.msra.mxu0 %v971
        %1007 = vmatprep.subr.mxu0 0.0
        %1008 = vmatpush2.xpose.msra.mxu0 0.0
        %1009 = vmatprep.subr.mxu0 0.0
        %1010 = vmatpush2.xpose.msra.mxu0 0.0
        %1011 = vmatprep.subr.mxu0 0.0
        %1012 = vmatpush2.xpose.msra.mxu0 0.0
        %1013 = vmatprep.subr.mxu0 0.0
        %1014 = vmatpush2.xpose.msra.mxu0 0.0
        %1015 = vmatprep.subr.mxu0 0.0
        %1016 = vmatpush2.xpose.msra.mxu0 0.0
        %1017 = vmatprep.subr.mxu0 0.0
        %1018 = vmatpush2.xpose.msra.mxu0 0.0
        %1019 = vmatprep.subr.mxu0 0.0
        %1020 = vmatpush2.xpose.msra.mxu0 0.0
        %1021 = vmatprep.subr.mxu0 0.0
        %1022 = vmatpush2.xpose.msra.mxu0 0.0
        %1023 = vmatprep.subr.mxu0 0.0
        %1024 = vmatpush2.xpose.msra.mxu0 0.0
        %1025 = vmatprep.subr.mxu0 0.0
        %1026 = vmatpush2.xpose.msra.mxu0 0.0
        %1027 = vmatprep.subr.mxu0 0.0
        %1028 = vmatpush2.xpose.msra.mxu0 0.0
        %1029 = vmatprep.subr.mxu0 0.0
        %1030 = vmatpush2.xpose.msra.mxu0 0.0
        %1031 = vmatprep.subr.mxu0 0.0
        %1032 = vmatpush2.xpose.msra.mxu0 0.0
        %1033 = vmatprep.subr.mxu0 0.0
        %1034 = vmatpush2.xpose.msra.mxu0 0.0
        %1035 = vmatprep.subr.mxu0 0.0
        %1036 = vmatpush2.xpose.msra.mxu0 0.0
        %1037 = vmatprep.subr.mxu0 0.0
        %1038 = vmatpush2.xpose.msra.mxu0 0.0
        %1039 = vmatprep.mubr.f32.mxu0 0.0
        %1040 = vmatmul.mubr.f32.gmra.mxu0 %v974
        %v1041 = vpop.f32.mrf.mxu0
        %v1042 = vadd.f32 0.0, %v1041
        %v1043 = vpop.f32.mrf.mxu0
        %1044 = vdwg.mxu0
        %v1045 = vsel %vm832, %v1042, -inf
        %1046 = vmax.xlane.f32.xlu0 %v1045
        %v1047 = vpop.xlane.xlu0 %1046
        %v1048 = vrot.slane %v1047, 4
        %v1049 = vmax.f32 %v1047, %v1048
        %v1050 = vrot.slane %v1049, 2
        %v1051 = vmax.f32 %v1049, %v1050
        %v1052 = vrot.slane %v1051, 1
        %v1053 = vmax.f32 %v1051, %v1052
        %s1054 = vtos %v1053
        %v1055 = vstv %s1054
        %v1056 = vsub.f32 %v1042, %v1055
        %v1057 = vmul.f32 %v1056, 1.442695
        %v1058 = vpow.pop %v1057
        %v1059 = vsel %vm832, %v1058, 0.0
        %1060 = vadd.xlane.f32.xlu0 %v1059
        %v1061 = vpop.xlane.xlu0 %1060
        %v1062 = vmul.f32 %v1061, 4.0
        %v1063 = vrot.slane %v1059, 4
        %v1064 = vadd.f32 %v1059, %v1063
        %v1065 = vrot.slane %v1064, 2
        %v1066 = vadd.f32 %v1064, %v1065
        %v1067 = vrot.slane %v1066, 1
        %v1068 = vadd.f32 %v1066, %v1067
        %v1069 = vmul.f32 %v1068, 4.0
        %v1070 = vrcp.pop %v1062
        %v1071 = vmul.f32 %v1058, %v1070
        %v1072 = vadd.f32 %v966, %v1071
        %v1073 = vrcp.pop %v1069
        %v1074 = vmul.f32 %v1058, %v1073
        %v1075 = vadd.f32 %v969, %v1074
        %s1076 = scalar_lea.vmem [#allocation2], 24
        %v1077 = vld [vmem:[%s1076] sm:$0xff]
        %v1078 = vld [vmem:[%s1076 + $0x20] sm:$0xff]
        %s1079 = scalar_lea.vmem [#allocation3], 24
        %v1080 = vld [vmem:[%s1079] sm:$0xff]
        %1081 = vmatprep.subr.mxu0 0.0
        %1082 = vmatpush1.xpose.msra.mxu0 0.0
        %1083 = vmatprep.subr.mxu0 0.0
        %1084 = vmatpush1.xpose.msra.mxu0 0.0
        %1085 = vmatprep.subr.mxu0 0.0
        %1086 = vmatpush1.xpose.msra.mxu0 0.0
        %1087 = vmatprep.subr.mxu0 0.0
        %1088 = vmatpush1.xpose.msra.mxu0 0.0
        %1089 = vmatprep.subr.mxu0 0.0
        %1090 = vmatpush1.xpose.msra.mxu0 0.0
        %1091 = vmatprep.subr.mxu0 0.0
        %1092 = vmatpush1.xpose.msra.mxu0 0.0
        %1093 = vmatprep.subr.mxu0 0.0
        %1094 = vmatpush1.xpose.msra.mxu0 0.0
        %1095 = vmatprep.subr.mxu0 0.0
        %1096 = vmatpush1.xpose.msra.mxu0 0.0
        %1097 = vmatprep.subr.mxu0 0.0
        %1098 = vmatpush1.xpose.msra.mxu0 0.0
        %1099 = vmatprep.subr.mxu0 0.0
        %1100 = vmatpush1.xpose.msra.mxu0 0.0
        %1101 = vmatprep.subr.mxu0 0.0
        %1102 = vmatpush1.xpose.msra.mxu0 0.0
        %1103 = vmatprep.subr.mxu0 0.0
        %1104 = vmatpush1.xpose.msra.mxu0 0.0
        %1105 = vmatprep.subr.mxu0 0.0
        %1106 = vmatpush1.xpose.msra.mxu0 0.0
        %1107 = vmatprep.subr.mxu0 0.0
        %1108 = vmatpush1.xpose.msra.mxu0 0.0
        %1109 = vmatprep.subr.mxu0 0.0
        %1110 = vmatpush1.xpose.msra.mxu0 %v1078
        %1111 = vmatprep.subr.mxu0 0.0
        %1112 = vmatpush1.xpose.msra.mxu0 %v1077
        %1113 = vmatprep.subr.mxu0 0.0
        %1114 = vmatpush2.xpose.msra.mxu0 0.0
        %1115 = vmatprep.subr.mxu0 0.0
        %1116 = vmatpush2.xpose.msra.mxu0 0.0
        %1117 = vmatprep.subr.mxu0 0.0
        %1118 = vmatpush2.xpose.msra.mxu0 0.0
        %1119 = vmatprep.subr.mxu0 0.0
        %1120 = vmatpush2.xpose.msra.mxu0 0.0
        %1121 = vmatprep.subr.mxu0 0.0
        %1122 = vmatpush2.xpose.msra.mxu0 0.0
        %1123 = vmatprep.subr.mxu0 0.0
        %1124 = vmatpush2.xpose.msra.mxu0 0.0
        %1125 = vmatprep.subr.mxu0 0.0
        %1126 = vmatpush2.xpose.msra.mxu0 0.0
        %1127 = vmatprep.subr.mxu0 0.0
        %1128 = vmatpush2.xpose.msra.mxu0 0.0
        %1129 = vmatprep.subr.mxu0 0.0
        %1130 = vmatpush2.xpose.msra.mxu0 0.0
        %1131 = vmatprep.subr.mxu0 0.0
        %1132 = vmatpush2.xpose.msra.mxu0 0.0
        %1133 = vmatprep.subr.mxu0 0.0
        %1134 = vmatpush2.xpose.msra.mxu0 0.0
        %1135 = vmatprep.subr.mxu0 0.0
        %1136 = vmatpush2.xpose.msra.mxu0 0.0
        %1137 = vmatprep.subr.mxu0 0.0
        %1138 = vmatpush2.xpose.msra.mxu0 0.0
        %1139 = vmatprep.subr.mxu0 0.0
        %1140 = vmatpush2.xpose.msra.mxu0 0.0
        %1141 = vmatprep.subr.mxu0 0.0
        %1142 = vmatpush2.xpose.msra.mxu0 0.0
        %1143 = vmatprep.subr.mxu0 0.0
        %1144 = vmatpush2.xpose.msra.mxu0 0.0
        %1145 = vmatprep.mubr.f32.mxu0 0.0
        %1146 = vmatmul.mubr.f32.gmra.mxu0 %v1080
        %v1147 = vpop.f32.mrf.mxu0
        %v1148 = vadd.f32 0.0, %v1147
        %v1149 = vpop.f32.mrf.mxu0
        %1150 = vdwg.mxu0
        %v1151 = vsel %vm832, %v1148, -inf
        %1152 = vmax.xlane.f32.xlu0 %v1151
        %v1153 = vpop.xlane.xlu0 %1152
        %v1154 = vrot.slane %v1153, 4
        %v1155 = vmax.f32 %v1153, %v1154
        %v1156 = vrot.slane %v1155, 2
        %v1157 = vmax.f32 %v1155, %v1156
        %v1158 = vrot.slane %v1157, 1
        %v1159 = vmax.f32 %v1157, %v1158
        %s1160 = vtos %v1159
        %v1161 = vstv %s1160
        %v1162 = vsub.f32 %v1148, %v1161
        %v1163 = vmul.f32 %v1162, 1.442695
        %v1164 = vpow.pop %v1163
        %v1165 = vsel %vm832, %v1164, 0.0
        %1166 = vadd.xlane.f32.xlu0 %v1165
        %v1167 = vpop.xlane.xlu0 %1166
        %v1168 = vmul.f32 %v1167, 4.0
        %v1169 = vrot.slane %v1165, 4
        %v1170 = vadd.f32 %v1165, %v1169
        %v1171 = vrot.slane %v1170, 2
        %v1172 = vadd.f32 %v1170, %v1171
        %v1173 = vrot.slane %v1172, 1
        %v1174 = vadd.f32 %v1172, %v1173
        %v1175 = vmul.f32 %v1174, 4.0
        %v1176 = vrcp.pop %v1168
        %v1177 = vmul.f32 %v1164, %v1176
        %v1178 = vadd.f32 %v1072, %v1177
        %v1179 = vrcp.pop %v1175
        %v1180 = vmul.f32 %v1164, %v1179
        %v1181 = vadd.f32 %v1075, %v1180
        %v1183 = vsel %vm832, %v1178, 0
        %1185 = vmatprep.subr.mxu0 0.0
        %1186 = vmatpush1.msra.mxu0 0.0
        %1187 = vmatprep.subr.mxu0 0.0
        %1188 = vmatpush1.msra.mxu0 0.0
        %1189 = vmatprep.subr.mxu0 0.0
        %1190 = vmatpush1.msra.mxu0 0.0
        %1191 = vmatprep.subr.mxu0 0.0
        %1192 = vmatpush1.msra.mxu0 0.0
        %1193 = vmatprep.subr.mxu0 0.0
        %1194 = vmatpush1.msra.mxu0 0.0
        %1195 = vmatprep.subr.mxu0 0.0
        %1196 = vmatpush1.msra.mxu0 0.0
        %1197 = vmatprep.subr.mxu0 0.0
        %1198 = vmatpush1.msra.mxu0 0.0
        %1199 = vmatprep.subr.mxu0 0.0
        %1200 = vmatpush1.msra.mxu0 0.0
        %1201 = vmatprep.subr.mxu0 0.0
        %1202 = vmatpush1.msra.mxu0 0.0
        %1203 = vmatprep.subr.mxu0 0.0
        %1204 = vmatpush1.msra.mxu0 0.0
        %1205 = vmatprep.subr.mxu0 0.0
        %1206 = vmatpush1.msra.mxu0 0.0
        %1207 = vmatprep.subr.mxu0 0.0
        %1208 = vmatpush1.msra.mxu0 0.0
        %1209 = vmatprep.subr.mxu0 0.0
        %1210 = vmatpush1.msra.mxu0 0.0
        %1211 = vmatprep.subr.mxu0 0.0
        %1212 = vmatpush1.msra.mxu0 0.0
        %1213 = vmatprep.subr.mxu0 0.0
        %1214 = vmatpush1.msra.mxu0 %v321
        %1215 = vmatprep.subr.mxu0 0.0
        %1216 = vmatpush1.msra.mxu0 %v320
        %1217 = vmatprep.subr.mxu0 0.0
        %1218 = vmatpush2.msra.mxu0 0.0
        %1219 = vmatprep.subr.mxu0 0.0
        %1220 = vmatpush2.msra.mxu0 0.0
        %1221 = vmatprep.subr.mxu0 0.0
        %1222 = vmatpush2.msra.mxu0 0.0
        %1223 = vmatprep.subr.mxu0 0.0
        %1224 = vmatpush2.msra.mxu0 0.0
        %1225 = vmatprep.subr.mxu0 0.0
        %1226 = vmatpush2.msra.mxu0 0.0
        %1227 = vmatprep.subr.mxu0 0.0
        %1228 = vmatpush2.msra.mxu0 0.0
        %1229 = vmatprep.subr.mxu0 0.0
        %1230 = vmatpush2.msra.mxu0 0.0
        %1231 = vmatprep.subr.mxu0 0.0
        %1232 = vmatpush2.msra.mxu0 0.0
        %1233 = vmatprep.subr.mxu0 0.0
        %1234 = vmatpush2.msra.mxu0 0.0
        %1235 = vmatprep.subr.mxu0 0.0
        %1236 = vmatpush2.msra.mxu0 0.0
        %1237 = vmatprep.subr.mxu0 0.0
        %1238 = vmatpush2.msra.mxu0 0.0
        %1239 = vmatprep.subr.mxu0 0.0
        %1240 = vmatpush2.msra.mxu0 0.0
        %1241 = vmatprep.subr.mxu0 0.0
        %1242 = vmatpush2.msra.mxu0 0.0
        %1243 = vmatprep.subr.mxu0 0.0
        %1244 = vmatpush2.msra.mxu0 0.0
        %1245 = vmatprep.subr.mxu0 0.0
        %1246 = vmatpush2.msra.mxu0 0.0
        %1247 = vmatprep.subr.mxu0 0.0
        %1248 = vmatpush2.msra.mxu0 0.0
        %1249 = vmatprep.mubr.f32.mxu0 0.0
        %1250 = vmatmul.mubr.f32.gmra.mxu0 %v1183
        %v1251 = vpop.f32.mrf.mxu0
        %v1252 = vadd.f32 0.0, %v1251
        %v1253 = vpop.f32.mrf.mxu0
        %1254 = vdwg.mxu0
        %1255 = vst [vmem:[%s312] sm:$0xff] %v1252
        %1256 = vxpose.xlu0.b32.start [1/16] %v1181, 128
        %1257 = vxpose.xlu0.b32.cont [2/16] 0.0, 128
        %1258 = vxpose.xlu0.b32.cont [3/16] 0.0, 128
        %1259 = vxpose.xlu0.b32.cont [4/16] 0.0, 128
        %1260 = vxpose.xlu0.b32.cont [5/16] 0.0, 128
        %1261 = vxpose.xlu0.b32.cont [6/16] 0.0, 128
        %1262 = vxpose.xlu0.b32.cont [7/16] 0.0, 128
        %1263 = vxpose.xlu0.b32.cont [8/16] 0.0, 128
        %1264 = vxpose.xlu0.b32.cont [9/16] 0.0, 128
        %1265 = vxpose.xlu0.b32.cont [10/16] 0.0, 128
        %1266 = vxpose.xlu0.b32.cont [11/16] 0.0, 128
        %1267 = vxpose.xlu0.b32.cont [12/16] 0.0, 128
        %1268 = vxpose.xlu0.b32.cont [13/16] 0.0, 128
        %1269 = vxpose.xlu0.b32.cont [14/16] 0.0, 128
        %1270 = vxpose.xlu0.b32.cont [15/16] 0.0, 128
        %1271 = vxpose.xlu0.b32.end [16/16] 0.0, 128
        %v1272 = vpop.trf.xlu0
        %v1273 = vpop.trf.xlu0
        %v1274 = vpop.trf.xlu0
        %v1275 = vpop.trf.xlu0
        %v1276 = vpop.trf.xlu0
        %v1277 = vpop.trf.xlu0
        %v1278 = vpop.trf.xlu0
        %v1279 = vpop.trf.xlu0
        %v1280 = vpop.trf.xlu0
        %v1281 = vpop.trf.xlu0
        %v1282 = vpop.trf.xlu0
        %v1283 = vpop.trf.xlu0
        %v1284 = vpop.trf.xlu0
        %v1285 = vpop.trf.xlu0
        %v1286 = vpop.trf.xlu0
        %v1287 = vpop.trf.xlu0
        %vm1288 = vcmask 64512
        %v1290 = vsel %vm1288, %v1272, 0
        %v1293 = vsel %vm1288, %v1273, 0
        %1295 = vmatprep.subr.mxu0 0.0
        %1296 = vmatpush1.msra.mxu0 0.0
        %1297 = vmatprep.subr.mxu0 0.0
        %1298 = vmatpush1.msra.mxu0 0.0
        %1299 = vmatprep.subr.mxu0 0.0
        %1300 = vmatpush1.msra.mxu0 0.0
        %1301 = vmatprep.subr.mxu0 0.0
        %1302 = vmatpush1.msra.mxu0 0.0
        %1303 = vmatprep.subr.mxu0 0.0
        %1304 = vmatpush1.msra.mxu0 0.0
        %1305 = vmatprep.subr.mxu0 0.0
        %1306 = vmatpush1.msra.mxu0 0.0
        %1307 = vmatprep.subr.mxu0 0.0
        %1308 = vmatpush1.msra.mxu0 0.0
        %1309 = vmatprep.subr.mxu0 0.0
        %1310 = vmatpush1.msra.mxu0 0.0
        %1311 = vmatprep.subr.mxu0 0.0
        %1312 = vmatpush1.msra.mxu0 0.0
        %1313 = vmatprep.subr.mxu0 0.0
        %1314 = vmatpush1.msra.mxu0 0.0
        %1315 = vmatprep.subr.mxu0 0.0
        %1316 = vmatpush1.msra.mxu0 0.0
        %1317 = vmatprep.subr.mxu0 0.0
        %1318 = vmatpush1.msra.mxu0 0.0
        %1319 = vmatprep.subr.mxu0 0.0
        %1320 = vmatpush1.msra.mxu0 0.0
        %1321 = vmatprep.subr.mxu0 0.0
        %1322 = vmatpush1.msra.mxu0 0.0
        %1323 = vmatprep.subr.mxu0 0.0
        %1324 = vmatpush1.msra.mxu0 0.0
        %1325 = vmatprep.subr.mxu0 0.0
        %1326 = vmatpush1.msra.mxu0 %v322
        %1327 = vmatprep.subr.mxu0 0.0
        %1328 = vmatpush2.msra.mxu0 0.0
        %1329 = vmatprep.subr.mxu0 0.0
        %1330 = vmatpush2.msra.mxu0 0.0
        %1331 = vmatprep.subr.mxu0 0.0
        %1332 = vmatpush2.msra.mxu0 0.0
        %1333 = vmatprep.subr.mxu0 0.0
        %1334 = vmatpush2.msra.mxu0 0.0
        %1335 = vmatprep.subr.mxu0 0.0
        %1336 = vmatpush2.msra.mxu0 0.0
        %1337 = vmatprep.subr.mxu0 0.0
        %1338 = vmatpush2.msra.mxu0 0.0
        %1339 = vmatprep.subr.mxu0 0.0
        %1340 = vmatpush2.msra.mxu0 0.0
        %1341 = vmatprep.subr.mxu0 0.0
        %1342 = vmatpush2.msra.mxu0 0.0
        %1343 = vmatprep.subr.mxu0 0.0
        %1344 = vmatpush2.msra.mxu0 0.0
        %1345 = vmatprep.subr.mxu0 0.0
        %1346 = vmatpush2.msra.mxu0 0.0
        %1347 = vmatprep.subr.mxu0 0.0
        %1348 = vmatpush2.msra.mxu0 0.0
        %1349 = vmatprep.subr.mxu0 0.0
        %1350 = vmatpush2.msra.mxu0 0.0
        %1351 = vmatprep.subr.mxu0 0.0
        %1352 = vmatpush2.msra.mxu0 0.0
        %1353 = vmatprep.subr.mxu0 0.0
        %1354 = vmatpush2.msra.mxu0 0.0
        %1355 = vmatprep.subr.mxu0 0.0
        %1356 = vmatpush2.msra.mxu0 0.0
        %1357 = vmatprep.subr.mxu0 0.0
        %1358 = vmatpush2.msra.mxu0 0.0
        %1359 = vmatprep.mubr.f32.mxu0 0.0
        %1360 = vmatmul.mubr.f32.gmra.mxu0 %v1290
        %v1361 = vpop.f32.mrf.mxu0
        %v1362 = vadd.f32 0.0, %v1361
        %v1363 = vpop.f32.mrf.mxu0
        %1364 = vmatprep.mubr.f32.mxu0 0.0
        %1365 = vmatmul.mubr.f32.gmra.mxu0 %v1293
        %v1366 = vpop.f32.mrf.mxu0
        %v1367 = vadd.f32 0.0, %v1366
        %v1368 = vpop.f32.mrf.mxu0
        %1369 = vdwg.mxu0
        %1370 = vst [vmem:[%s319] sm:$0xff] %v1362
        %1371 = vst [vmem:[%s319 + $0x8] sm:$0xff] %v1367
        %s1372 = sand.u32 %s132, 1
        %s1373 = scalar_lea.sflag [#allocation6], %s1372
        %s1374 = sand.u32 %s132, 1
        %s1375 = smul.addr %s1374, 8
        %s1376 = scalar_lea.vmem [#allocation12], %s1375
        %s1377 = sand.u32 %s158, 1
        %s1378 = scalar_lea.sflag [#allocation14], %s1377
        %s1379 = sand.u32 %s158, 1
        %s1380 = smul.addr %s1379, 16
        %s1381 = scalar_lea.vmem [#allocation13], %s1380
        // Predicated region
        $region53: #{tpu_custom_call.1} parent=35 // pred_check
          %p1382 = pneg %p142
        $region54: #{tpu_custom_call.1} parent=35 // pred_check_branch
          %1384 = sbr.rel (%p1382) target = $region56
        $region55: #{tpu_custom_call.1} parent=35 // pred_region
          %s1386 = ssub.s32 128, 128
          %1387 = vsyncadd %s1373, %s1386
          %s1388 = smul.addr %s30, 128
          %s1389 = scalar_lea.hbm %s4, %s1388
          %s1391 = sshll.u32 %s1376, 4
          %s1392 = int_to_ptr.vmem [resolvable:$true] %s1391
          %1394 = dma.vmem_to_hbm [thread:$0]  %s1392, 128, %s1389, %s1373
        $region56: #{tpu_custom_call.1} parent=35 // pred_fallthru
          _
        // Predicated region
        $region57: #{tpu_custom_call.1} parent=35 // pred_check
          %p1395 = pneg %p168
        $region58: #{tpu_custom_call.1} parent=35 // pred_check_branch
          %1397 = sbr.rel (%p1395) target = $region60
        $region59: #{tpu_custom_call.1} parent=35 // pred_region
          %s1399 = ssub.s32 256, 256
          %1400 = vsyncadd %s1378, %s1399
          %s1401 = smul.addr %s30, 2
          %s1402 = smul.addr %s1401, 128
          %s1403 = scalar_lea.hbm %s5, %s1402
          %s1404 = sshll.u32 %s1381, 4
          %s1405 = int_to_ptr.vmem [resolvable:$true] %s1404
          %1410 = dma.vmem_to_hbm [thread:$0]  %s1405, 256, %s1403, %s1378, 128, 128, 8
        $region60: #{tpu_custom_call.1} parent=35 // pred_fallthru
          _
      $region36: #{tpu_custom_call.1} parent=5 // pred_fallthru
        _
      %p1411 = scmp.le.s32.totalorder 2, %s25
      // Predicated region
      $region61: #{tpu_custom_call.1} parent=5 // pred_check
        %p1412 = pneg %p1411
      $region62: #{tpu_custom_call.1} parent=5 // pred_check_branch
        %1414 = sbr.rel (%p1412) target = $region64
      $region63: #{tpu_custom_call.1} parent=5 // pred_region
        %s1415 = ssub.s32 %s25, 2
        // Predicated region
        $region65: #{tpu_custom_call.1} parent=63 // pred_check
          %p1416 = pneg %p148
        $region66: #{tpu_custom_call.1} parent=63 // pred_check_branch
          %1418 = sbr.rel (%p1416) target = $region68
        $region67: #{tpu_custom_call.1} parent=63 // pred_region
          %s1419 = sand.u32 %s133, 1
          %s1420 = scalar_lea.sflag [#allocation6], %s1419
          %s1421 = sand.u32 %s133, 1
          %s1422 = smul.addr %s1421, 8
          %s1423 = scalar_lea.vmem [#allocation12], %s1422
          %1424 = dma.done %s1420, 128
        $region68: #{tpu_custom_call.1} parent=63 // pred_fallthru
          _
        // Predicated region
        $region69: #{tpu_custom_call.1} parent=63 // pred_check
          %p1425 = pneg %p174
        $region70: #{tpu_custom_call.1} parent=63 // pred_check_branch
          %1427 = sbr.rel (%p1425) target = $region72
        $region71: #{tpu_custom_call.1} parent=63 // pred_region
          %s1428 = sand.u32 %s159, 1
          %s1429 = scalar_lea.sflag [#allocation14], %s1428
          %s1430 = sand.u32 %s159, 1
          %s1431 = smul.addr %s1430, 16
          %s1432 = scalar_lea.vmem [#allocation13], %s1431
          %1433 = dma.done %s1429, 256
        $region72: #{tpu_custom_call.1} parent=63 // pred_fallthru
          _
      $region64: #{tpu_custom_call.1} parent=5 // pred_fallthru
        _
    $region6: #{tpu_custom_call.1} parent=1 // loop_footer
      %s29 = sadd.s32 1, %s25
    $region7: #{tpu_custom_call.1} parent=1 // loop_footer_branch
      %24 = sbr.rel target = $region3
    $region8: #{tpu_custom_call.1} parent=1 // loop_exit
      _
    %1434 = vsyncpa [#allocation5], 1
    %s1435 = scalar_lea.sflag [#allocation5], 1
    %1436 = vsyncpa %s1435, 1
    %1437 = vsyncpa [#allocation8], 1
    %s1438 = scalar_lea.sflag [#allocation8], 1
    %1439 = vsyncpa %s1438, 1
    %1440 = vsyncpa [#allocation11], 1
    %1441 = vsyncpa [#allocation6], 1
    %s1442 = scalar_lea.sflag [#allocation6], 1
    %1443 = vsyncpa %s1442, 1
    %1444 = vsyncpa [#allocation14], 1
    %s1445 = scalar_lea.sflag [#allocation14], 1
    %1446 = vsyncpa %s1445, 1

</llo_original>
